<compile_context>
chip_gen: v7x
topology: tpu7x:2x2x1
jax: 0.10.0
libtpu: 0.0.40
codegen_flags: <defaults>
</compile_context>

<pallas_src>
import functools

import jax
import jax.numpy as jnp
from jax.experimental import pallas as pl
from jax.experimental.pallas import tpu as pltpu


# -----------------------------------------------------------------------------
# Single-invocation fused kernel: embedding + depth LSTM layers + projection.
# Gate column order inside the kernel is (i, f, o, g); activations are
# sigmoid/sigmoid/sigmoid/tanh, matching PyTorch semantics after the reorder.
# -----------------------------------------------------------------------------
def _fused_lstm_kernel(ids_ref, pre0_ref, whh0_ref, wf_ref, bf_ref, proj_ref,
                       out_ref, *, depth, seq_len):
    """Shapes:
      ids_ref  : (B, T)               int32  token ids in {0, 1}
      pre0_ref : (2, 4H)              f32    embed @ W_ih0^T + b0   (layer 0)
      whh0_ref : (H, 4H)              f32    W_hh0^T                (layer 0)
      wf_ref   : (max(L-1,1), 2H, 4H) f32    [W_ih^T ; W_hh^T] per layer >= 1
      bf_ref   : (max(L-1,1), 1, 4H)  f32    b_ih + b_hh      per layer >= 1
      proj_ref : (1, H)               f32    projection row (Linear, no bias)
      out_ref  : (B, 1)               f32
    """
    B = ids_ref.shape[0]
    H = whh0_ref.shape[0]

    ids = ids_ref[...]                                    # (B, T), loaded once

    # Layer-0 precomputed input-gate rows, broadcast to (B, 4H) once.
    pre0_row0 = jnp.broadcast_to(pre0_ref[0:1, :], (B, 4 * H))
    pre0_row1 = jnp.broadcast_to(pre0_ref[1:2, :], (B, 4 * H))

    # Invariant weights / biases: load + broadcast once, outside the time loop.
    whh0 = whh0_ref[...]                                  # (H, 4H)
    wf = [wf_ref[l] for l in range(depth - 1)]            # (2H, 4H) each
    bf = [jnp.broadcast_to(bf_ref[l], (B, 4 * H)) for l in range(depth - 1)]

    # Per-layer recurrent state kept entirely on-chip as traced values.
    h = [jnp.zeros((B, H), jnp.float32) for _ in range(depth)]
    c = [jnp.zeros((B, H), jnp.float32) for _ in range(depth)]

    def gate_update(gates, c_prev):
        # Gate order (i, f, o, g): sigmoid over the first 3H lanes only,
        # tanh over the last H lanes only (trims EUP work on the serial chain).
        sg = jax.nn.sigmoid(gates[:, :3 * H])
        g_ = jnp.tanh(gates[:, 3 * H:])
        i_ = sg[:, 0 * H:1 * H]
        f_ = sg[:, 1 * H:2 * H]
        o_ = sg[:, 2 * H:3 * H]
        c_new = f_ * c_prev + i_ * g_
        h_new = o_ * jnp.tanh(c_new)
        return h_new, c_new

    # Time recurrence fully unrolled at trace time (T small & static); all
    # layers advance within each step so no per-step hidden ever hits HBM.
    for t in range(seq_len):
        # Layer 0: the whole x@W_ih0^T + b0 term is a 2-row select (no matmul).
        sel = ids[:, t:t + 1] != 0                        # (B, 1) bool
        gates0 = jnp.where(sel, pre0_row1, pre0_row0) + jnp.dot(
            h[0], whh0, preferred_element_type=jnp.float32)
        h[0], c[0] = gate_update(gates0, c[0])
        x = h[0]

        # Layers >= 1: one fused 2H-deep matmul per step.
        for l in range(1, depth):
            xh = jnp.concatenate([x, h[l]], axis=1)       # (B, 2H)
            gates = jnp.dot(xh, wf[l - 1],
                            preferred_element_type=jnp.float32) + bf[l - 1]
            h[l], c[l] = gate_update(gates, c[l])
            x = h[l]

    # Final projection: (B, H) * (1, H) -> lane reduce -> (B, 1).
    # VPU multiply + XLU reduction; avoids a 1-output-lane MXU matmul.
    out_ref[...] = jnp.sum(h[depth - 1] * proj_ref[...], axis=-1, keepdims=True)


def model_forward(inp, kparams):
    """inp: (B, T, 1) int of {0,1}. Returns (B, 1) float32 == Model.forward."""
    ids = inp.squeeze(-1).astype(jnp.int32)               # (B, T)
    B, T = ids.shape
    depth = int(kparams["depth"])
    kernel = functools.partial(_fused_lstm_kernel, depth=depth, seq_len=T)
    vmem = pl.BlockSpec(memory_space=pltpu.MemorySpace.VMEM)  # fully resident
    return pl.pallas_call(
        kernel,
        out_shape=jax.ShapeDtypeStruct((B, 1), jnp.float32),
        in_specs=[vmem] * 6,
        out_specs=vmem,
    )(ids, kparams["pre0"], kparams["whh0"], kparams["wf"], kparams["bf"],
      kparams["proj_row"])


# -----------------------------------------------------------------------------
# Parameter init (PyTorch-style uniform(-1/sqrt(H), 1/sqrt(H))) and packing.
# Raw (PyTorch-layout, i/f/g/o) weights are kept for the pure-JAX reference;
# packed kernel params use (i, f, o, g) column order, the layer-0 pre-table,
# and fused [W_ih^T ; W_hh^T] blocks for layers >= 1.
# -----------------------------------------------------------------------------
def init_params(key, size, depth):
    H = size
    k = 1.0 / jnp.sqrt(jnp.float32(H))
    keys = jax.random.split(key, 2 + 4 * depth)
    embed = jax.random.normal(keys[0], (2, H), jnp.float32)
    proj_row = jax.random.uniform(keys[1], (1, H), jnp.float32, -k, k)

    def reorder_rows(w):           # gate blocks (i, f, g, o) -> (i, f, o, g)
        return jnp.concatenate(
            [w[:H], w[H:2 * H], w[3 * H:], w[2 * H:3 * H]], axis=0)

    raw_layers = []
    wf_list, bf_list = [], []
    pre0 = None
    whh0 = None
    for l in range(depth):
        kk = keys[2 + 4 * l: 2 + 4 * (l + 1)]
        w_ih = jax.random.uniform(kk[0], (4 * H, H), jnp.float32, -k, k)
        w_hh = jax.random.uniform(kk[1], (4 * H, H), jnp.float32, -k, k)
        b_ih = jax.random.uniform(kk[2], (4 * H,), jnp.float32, -k, k)
        b_hh = jax.random.uniform(kk[3], (4 * H,), jnp.float32, -k, k)
        raw_layers.append((w_ih, w_hh, b_ih, b_hh))

        w_ih_r = reorder_rows(w_ih)                       # (4H, H), ifog order
        w_hh_r = reorder_rows(w_hh)
        b_r = reorder_rows((b_ih + b_hh).reshape(4 * H, 1)).reshape(1, 4 * H)

        if l == 0:
            # 2-row input-gate table: embed @ W_ih0^T + b0   -> (2, 4H)
            pre0 = embed @ w_ih_r.T + b_r
            whh0 = w_hh_r.T                                # (H, 4H)
        else:
            wf_list.append(jnp.concatenate([w_ih_r.T, w_hh_r.T], axis=0))
            bf_list.append(b_r)

    if depth > 1:
        wf = jnp.stack(wf_list)                           # (L-1, 2H, 4H)
        bf = jnp.stack(bf_list)                           # (L-1, 1, 4H)
    else:
        wf = jnp.zeros((1, 2 * H, 4 * H), jnp.float32)    # unused placeholder
        bf = jnp.zeros((1, 1, 4 * H), jnp.float32)

    kernel_params = {
        "depth": depth,
        "pre0": pre0,
        "whh0": whh0,
        "wf": wf,
        "bf": bf,
        "proj_row": proj_row,
    }
    raw_params = {
        "embed": embed,
        "proj_row": proj_row,
        "layers": raw_layers,
    }
    return kernel_params, raw_params


# Pure-JAX reference (gather embedding + lax.scan LSTM, PyTorch i/f/g/o gate
# order and raw weight layout) for numerics checking of all the repacking.
def _ref_forward(inp, raw):
    ids = inp.squeeze(-1).astype(jnp.int32)
    x = jnp.take(raw["embed"], ids, axis=0)               # (B, T, H)
    x = jnp.transpose(x, (1, 0, 2))                       # (T, B, H)
    B = x.shape[1]
    H = raw["embed"].shape[1]
    for (w_ih, w_hh, b_ih, b_hh) in raw["layers"]:
        wih_t = w_ih.T
        whh_t = w_hh.T
        bias = (b_ih + b_hh).reshape(1, 4 * H)

        def step(carry, x_t, wih_t=wih_t, whh_t=whh_t, bias=bias):
            h, c = carry
            gates = x_t @ wih_t + h @ whh_t + bias
            i = jax.nn.sigmoid(gates[:, :H])
            f = jax.nn.sigmoid(gates[:, H:2 * H])
            g = jnp.tanh(gates[:, 2 * H:3 * H])
            o = jax.nn.sigmoid(gates[:, 3 * H:])
            c = f * c + i * g
            h = o * jnp.tanh(c)
            return (h, c), h

        init = (jnp.zeros((B, H), jnp.float32), jnp.zeros((B, H), jnp.float32))
        _, x = jax.lax.scan(step, init, x)
    return x[-1] @ raw["proj_row"].T


if __name__ == "__main__":
    SIZE, DEPTH = 32, 2          # hidden size, LSTM layers
    BATCH, SEQ = 2, 8

    root = jax.random.PRNGKey(0)
    k_inp, k_par = jax.random.split(root)
    inp = jax.random.bernoulli(k_inp, 0.5, (BATCH, SEQ, 1)).astype(jnp.int32)
    kparams, raw = init_params(k_par, SIZE, DEPTH)

    out = jax.block_until_ready(model_forward(inp, kparams))
    ref = jax.block_until_ready(_ref_forward(inp, raw))

    assert out.shape == (BATCH, 1), out.shape
    assert jnp.allclose(out, ref, atol=1e-5, rtol=1e-5), (out, ref)
    print("KERNEL_OK")
</pallas_src>

<mosaic_0001>
module attributes {stable_mosaic.version = 11 : i64} {
  func.func @_fused_lstm_kernel(%arg0: memref<2x8xi32, #tpu.memory_space<vmem>>, %arg1: memref<2x128xf32, #tpu.memory_space<vmem>>, %arg2: memref<32x128xf32, #tpu.memory_space<vmem>>, %arg3: memref<1x64x128xf32, #tpu.memory_space<vmem>>, %arg4: memref<1x1x128xf32, #tpu.memory_space<vmem>>, %arg5: memref<1x32xf32, #tpu.memory_space<vmem>>, %arg6: memref<2x1xf32, #tpu.memory_space<vmem>>) attributes {dimension_semantics = [], scalar_prefetch = 0 : i64, scratch_operands = 0 : i64, tpu.core_type = #tpu.core_type<tc>} {
    %c0 = arith.constant 0 : index
    %c0_0 = arith.constant 0 : index
    %0 = vector.load %arg0[%c0, %c0_0] : memref<2x8xi32, #tpu.memory_space<vmem>>, vector<2x8xi32>
    %c0_1 = arith.constant 0 : index
    %c0_2 = arith.constant 0 : index
    %1 = vector.load %arg1[%c0_1, %c0_2] : memref<2x128xf32, #tpu.memory_space<vmem>>, vector<1x128xf32>
    %2 = vector.shape_cast %1 : vector<1x128xf32> to vector<1x128xf32>
    %3 = vector.broadcast %2 : vector<1x128xf32> to vector<2x128xf32>
    %c1 = arith.constant 1 : index
    %c0_3 = arith.constant 0 : index
    %4 = vector.load %arg1[%c1, %c0_3] : memref<2x128xf32, #tpu.memory_space<vmem>>, vector<1x128xf32>
    %5 = vector.shape_cast %4 : vector<1x128xf32> to vector<1x128xf32>
    %6 = vector.broadcast %5 : vector<1x128xf32> to vector<2x128xf32>
    %c0_4 = arith.constant 0 : index
    %c0_5 = arith.constant 0 : index
    %7 = vector.load %arg2[%c0_4, %c0_5] : memref<32x128xf32, #tpu.memory_space<vmem>>, vector<32x128xf32>
    %c0_6 = arith.constant 0 : index
    %c0_7 = arith.constant 0 : index
    %c0_8 = arith.constant 0 : index
    %8 = vector.load %arg3[%c0_6, %c0_7, %c0_8] : memref<1x64x128xf32, #tpu.memory_space<vmem>>, vector<1x64x128xf32>
    %9 = vector.shape_cast %8 : vector<1x64x128xf32> to vector<64x128xf32>
    %c0_9 = arith.constant 0 : index
    %c0_10 = arith.constant 0 : index
    %c0_11 = arith.constant 0 : index
    %10 = vector.load %arg4[%c0_9, %c0_10, %c0_11] : memref<1x1x128xf32, #tpu.memory_space<vmem>>, vector<1x1x128xf32>
    %11 = vector.shape_cast %10 : vector<1x1x128xf32> to vector<1x128xf32>
    %12 = vector.shape_cast %11 : vector<1x128xf32> to vector<1x128xf32>
    %13 = vector.broadcast %12 : vector<1x128xf32> to vector<2x128xf32>
    %cst = arith.constant 0.000000e+00 : f32
    %14 = vector.broadcast %cst : f32 to vector<2x32xf32>
    %cst_12 = arith.constant 0.000000e+00 : f32
    %15 = vector.broadcast %cst_12 : f32 to vector<2x32xf32>
    %cst_13 = arith.constant 0.000000e+00 : f32
    %16 = vector.broadcast %cst_13 : f32 to vector<2x32xf32>
    %cst_14 = arith.constant 0.000000e+00 : f32
    %17 = vector.broadcast %cst_14 : f32 to vector<2x32xf32>
    %18 = vector.extract_strided_slice %0 {offsets = [0, 0], sizes = [2, 1], strides = [1, 1]} : vector<2x8xi32> to vector<2x1xi32>
    %c0_i32 = arith.constant 0 : i32
    %19 = vector.broadcast %c0_i32 : i32 to vector<2x1xi32>
    %20 = arith.cmpi ne, %18, %19 : vector<2x1xi32>
    %21 = vector.shape_cast %20 : vector<2x1xi1> to vector<2x1xi1>
    %22 = vector.broadcast %21 : vector<2x1xi1> to vector<2x128xi1>
    %23 = arith.select %22, %6, %3 : vector<2x128xi1>, vector<2x128xf32>
    %cst_15 = arith.constant dense<0.000000e+00> : vector<2x128xf32>
    %24 = tpu.matmul %14, %7, %cst_15 {dimension_numbers = #tpu.dot_dimension_numbers<[1], [0], [0], [1], [0, 0, 1, 1], [], []>} : vector<2x32xf32>, vector<32x128xf32>, vector<2x128xf32> -> vector<2x128xf32>
    %25 = arith.addf %23, %24 : vector<2x128xf32>
    %26 = vector.extract_strided_slice %25 {offsets = [0, 0], sizes = [2, 96], strides = [1, 1]} : vector<2x128xf32> to vector<2x96xf32>
    %27 = arith.negf %26 : vector<2x96xf32>
    %28 = math.exp %27 : vector<2x96xf32>
    %cst_16 = arith.constant 1.000000e+00 : f32
    %29 = vector.broadcast %cst_16 : f32 to vector<2x96xf32>
    %30 = arith.addf %29, %28 : vector<2x96xf32>
    %31 = arith.divf %29, %30 : vector<2x96xf32>
    %32 = vector.extract_strided_slice %25 {offsets = [0, 96], sizes = [2, 32], strides = [1, 1]} : vector<2x128xf32> to vector<2x32xf32>
    %33 = math.tanh %32 : vector<2x32xf32>
    %34 = vector.extract_strided_slice %31 {offsets = [0, 0], sizes = [2, 32], strides = [1, 1]} : vector<2x96xf32> to vector<2x32xf32>
    %35 = vector.extract_strided_slice %31 {offsets = [0, 32], sizes = [2, 32], strides = [1, 1]} : vector<2x96xf32> to vector<2x32xf32>
    %36 = vector.extract_strided_slice %31 {offsets = [0, 64], sizes = [2, 32], strides = [1, 1]} : vector<2x96xf32> to vector<2x32xf32>
    %37 = arith.mulf %35, %16 : vector<2x32xf32>
    %38 = arith.mulf %34, %33 : vector<2x32xf32>
    %39 = arith.addf %37, %38 : vector<2x32xf32>
    %40 = math.tanh %39 : vector<2x32xf32>
    %41 = arith.mulf %36, %40 : vector<2x32xf32>
    %42 = tpu.concatenate %41, %15 in 1 : vector<2x32xf32>, vector<2x32xf32> -> vector<2x64xf32>
    %cst_17 = arith.constant dense<0.000000e+00> : vector<2x128xf32>
    %43 = tpu.matmul %42, %9, %cst_17 {dimension_numbers = #tpu.dot_dimension_numbers<[1], [0], [0], [1], [0, 0, 1, 1], [], []>} : vector<2x64xf32>, vector<64x128xf32>, vector<2x128xf32> -> vector<2x128xf32>
    %44 = arith.addf %43, %13 : vector<2x128xf32>
    %45 = vector.extract_strided_slice %44 {offsets = [0, 0], sizes = [2, 96], strides = [1, 1]} : vector<2x128xf32> to vector<2x96xf32>
    %46 = arith.negf %45 : vector<2x96xf32>
    %47 = math.exp %46 : vector<2x96xf32>
    %cst_18 = arith.constant 1.000000e+00 : f32
    %48 = vector.broadcast %cst_18 : f32 to vector<2x96xf32>
    %49 = arith.addf %48, %47 : vector<2x96xf32>
    %50 = arith.divf %48, %49 : vector<2x96xf32>
    %51 = vector.extract_strided_slice %44 {offsets = [0, 96], sizes = [2, 32], strides = [1, 1]} : vector<2x128xf32> to vector<2x32xf32>
    %52 = math.tanh %51 : vector<2x32xf32>
    %53 = vector.extract_strided_slice %50 {offsets = [0, 0], sizes = [2, 32], strides = [1, 1]} : vector<2x96xf32> to vector<2x32xf32>
    %54 = vector.extract_strided_slice %50 {offsets = [0, 32], sizes = [2, 32], strides = [1, 1]} : vector<2x96xf32> to vector<2x32xf32>
    %55 = vector.extract_strided_slice %50 {offsets = [0, 64], sizes = [2, 32], strides = [1, 1]} : vector<2x96xf32> to vector<2x32xf32>
    %56 = arith.mulf %54, %17 : vector<2x32xf32>
    %57 = arith.mulf %53, %52 : vector<2x32xf32>
    %58 = arith.addf %56, %57 : vector<2x32xf32>
    %59 = math.tanh %58 : vector<2x32xf32>
    %60 = arith.mulf %55, %59 : vector<2x32xf32>
    %61 = vector.extract_strided_slice %0 {offsets = [0, 1], sizes = [2, 1], strides = [1, 1]} : vector<2x8xi32> to vector<2x1xi32>
    %c0_i32_19 = arith.constant 0 : i32
    %62 = vector.broadcast %c0_i32_19 : i32 to vector<2x1xi32>
    %63 = arith.cmpi ne, %61, %62 : vector<2x1xi32>
    %64 = vector.shape_cast %63 : vector<2x1xi1> to vector<2x1xi1>
    %65 = vector.broadcast %64 : vector<2x1xi1> to vector<2x128xi1>
    %66 = arith.select %65, %6, %3 : vector<2x128xi1>, vector<2x128xf32>
    %cst_20 = arith.constant dense<0.000000e+00> : vector<2x128xf32>
    %67 = tpu.matmul %41, %7, %cst_20 {dimension_numbers = #tpu.dot_dimension_numbers<[1], [0], [0], [1], [0, 0, 1, 1], [], []>} : vector<2x32xf32>, vector<32x128xf32>, vector<2x128xf32> -> vector<2x128xf32>
    %68 = arith.addf %66, %67 : vector<2x128xf32>
    %69 = vector.extract_strided_slice %68 {offsets = [0, 0], sizes = [2, 96], strides = [1, 1]} : vector<2x128xf32> to vector<2x96xf32>
    %70 = arith.negf %69 : vector<2x96xf32>
    %71 = math.exp %70 : vector<2x96xf32>
    %cst_21 = arith.constant 1.000000e+00 : f32
    %72 = vector.broadcast %cst_21 : f32 to vector<2x96xf32>
    %73 = arith.addf %72, %71 : vector<2x96xf32>
    %74 = arith.divf %72, %73 : vector<2x96xf32>
    %75 = vector.extract_strided_slice %68 {offsets = [0, 96], sizes = [2, 32], strides = [1, 1]} : vector<2x128xf32> to vector<2x32xf32>
    %76 = math.tanh %75 : vector<2x32xf32>
    %77 = vector.extract_strided_slice %74 {offsets = [0, 0], sizes = [2, 32], strides = [1, 1]} : vector<2x96xf32> to vector<2x32xf32>
    %78 = vector.extract_strided_slice %74 {offsets = [0, 32], sizes = [2, 32], strides = [1, 1]} : vector<2x96xf32> to vector<2x32xf32>
    %79 = vector.extract_strided_slice %74 {offsets = [0, 64], sizes = [2, 32], strides = [1, 1]} : vector<2x96xf32> to vector<2x32xf32>
    %80 = arith.mulf %78, %39 : vector<2x32xf32>
    %81 = arith.mulf %77, %76 : vector<2x32xf32>
    %82 = arith.addf %80, %81 : vector<2x32xf32>
    %83 = math.tanh %82 : vector<2x32xf32>
    %84 = arith.mulf %79, %83 : vector<2x32xf32>
    %85 = tpu.concatenate %84, %60 in 1 : vector<2x32xf32>, vector<2x32xf32> -> vector<2x64xf32>
    %cst_22 = arith.constant dense<0.000000e+00> : vector<2x128xf32>
    %86 = tpu.matmul %85, %9, %cst_22 {dimension_numbers = #tpu.dot_dimension_numbers<[1], [0], [0], [1], [0, 0, 1, 1], [], []>} : vector<2x64xf32>, vector<64x128xf32>, vector<2x128xf32> -> vector<2x128xf32>
    %87 = arith.addf %86, %13 : vector<2x128xf32>
    %88 = vector.extract_strided_slice %87 {offsets = [0, 0], sizes = [2, 96], strides = [1, 1]} : vector<2x128xf32> to vector<2x96xf32>
    %89 = arith.negf %88 : vector<2x96xf32>
    %90 = math.exp %89 : vector<2x96xf32>
    %cst_23 = arith.constant 1.000000e+00 : f32
    %91 = vector.broadcast %cst_23 : f32 to vector<2x96xf32>
    %92 = arith.addf %91, %90 : vector<2x96xf32>
    %93 = arith.divf %91, %92 : vector<2x96xf32>
    %94 = vector.extract_strided_slice %87 {offsets = [0, 96], sizes = [2, 32], strides = [1, 1]} : vector<2x128xf32> to vector<2x32xf32>
    %95 = math.tanh %94 : vector<2x32xf32>
    %96 = vector.extract_strided_slice %93 {offsets = [0, 0], sizes = [2, 32], strides = [1, 1]} : vector<2x96xf32> to vector<2x32xf32>
    %97 = vector.extract_strided_slice %93 {offsets = [0, 32], sizes = [2, 32], strides = [1, 1]} : vector<2x96xf32> to vector<2x32xf32>
    %98 = vector.extract_strided_slice %93 {offsets = [0, 64], sizes = [2, 32], strides = [1, 1]} : vector<2x96xf32> to vector<2x32xf32>
    %99 = arith.mulf %97, %58 : vector<2x32xf32>
    %100 = arith.mulf %96, %95 : vector<2x32xf32>
    %101 = arith.addf %99, %100 : vector<2x32xf32>
    %102 = math.tanh %101 : vector<2x32xf32>
    %103 = arith.mulf %98, %102 : vector<2x32xf32>
    %104 = vector.extract_strided_slice %0 {offsets = [0, 2], sizes = [2, 1], strides = [1, 1]} : vector<2x8xi32> to vector<2x1xi32>
    %c0_i32_24 = arith.constant 0 : i32
    %105 = vector.broadcast %c0_i32_24 : i32 to vector<2x1xi32>
    %106 = arith.cmpi ne, %104, %105 : vector<2x1xi32>
    %107 = vector.shape_cast %106 : vector<2x1xi1> to vector<2x1xi1>
    %108 = vector.broadcast %107 : vector<2x1xi1> to vector<2x128xi1>
    %109 = arith.select %108, %6, %3 : vector<2x128xi1>, vector<2x128xf32>
    %cst_25 = arith.constant dense<0.000000e+00> : vector<2x128xf32>
    %110 = tpu.matmul %84, %7, %cst_25 {dimension_numbers = #tpu.dot_dimension_numbers<[1], [0], [0], [1], [0, 0, 1, 1], [], []>} : vector<2x32xf32>, vector<32x128xf32>, vector<2x128xf32> -> vector<2x128xf32>
    %111 = arith.addf %109, %110 : vector<2x128xf32>
    %112 = vector.extract_strided_slice %111 {offsets = [0, 0], sizes = [2, 96], strides = [1, 1]} : vector<2x128xf32> to vector<2x96xf32>
    %113 = arith.negf %112 : vector<2x96xf32>
    %114 = math.exp %113 : vector<2x96xf32>
    %cst_26 = arith.constant 1.000000e+00 : f32
    %115 = vector.broadcast %cst_26 : f32 to vector<2x96xf32>
    %116 = arith.addf %115, %114 : vector<2x96xf32>
    %117 = arith.divf %115, %116 : vector<2x96xf32>
    %118 = vector.extract_strided_slice %111 {offsets = [0, 96], sizes = [2, 32], strides = [1, 1]} : vector<2x128xf32> to vector<2x32xf32>
    %119 = math.tanh %118 : vector<2x32xf32>
    %120 = vector.extract_strided_slice %117 {offsets = [0, 0], sizes = [2, 32], strides = [1, 1]} : vector<2x96xf32> to vector<2x32xf32>
    %121 = vector.extract_strided_slice %117 {offsets = [0, 32], sizes = [2, 32], strides = [1, 1]} : vector<2x96xf32> to vector<2x32xf32>
    %122 = vector.extract_strided_slice %117 {offsets = [0, 64], sizes = [2, 32], strides = [1, 1]} : vector<2x96xf32> to vector<2x32xf32>
    %123 = arith.mulf %121, %82 : vector<2x32xf32>
    %124 = arith.mulf %120, %119 : vector<2x32xf32>
    %125 = arith.addf %123, %124 : vector<2x32xf32>
    %126 = math.tanh %125 : vector<2x32xf32>
    %127 = arith.mulf %122, %126 : vector<2x32xf32>
    %128 = tpu.concatenate %127, %103 in 1 : vector<2x32xf32>, vector<2x32xf32> -> vector<2x64xf32>
    %cst_27 = arith.constant dense<0.000000e+00> : vector<2x128xf32>
    %129 = tpu.matmul %128, %9, %cst_27 {dimension_numbers = #tpu.dot_dimension_numbers<[1], [0], [0], [1], [0, 0, 1, 1], [], []>} : vector<2x64xf32>, vector<64x128xf32>, vector<2x128xf32> -> vector<2x128xf32>
    %130 = arith.addf %129, %13 : vector<2x128xf32>
    %131 = vector.extract_strided_slice %130 {offsets = [0, 0], sizes = [2, 96], strides = [1, 1]} : vector<2x128xf32> to vector<2x96xf32>
    %132 = arith.negf %131 : vector<2x96xf32>
    %133 = math.exp %132 : vector<2x96xf32>
    %cst_28 = arith.constant 1.000000e+00 : f32
    %134 = vector.broadcast %cst_28 : f32 to vector<2x96xf32>
    %135 = arith.addf %134, %133 : vector<2x96xf32>
    %136 = arith.divf %134, %135 : vector<2x96xf32>
    %137 = vector.extract_strided_slice %130 {offsets = [0, 96], sizes = [2, 32], strides = [1, 1]} : vector<2x128xf32> to vector<2x32xf32>
    %138 = math.tanh %137 : vector<2x32xf32>
    %139 = vector.extract_strided_slice %136 {offsets = [0, 0], sizes = [2, 32], strides = [1, 1]} : vector<2x96xf32> to vector<2x32xf32>
    %140 = vector.extract_strided_slice %136 {offsets = [0, 32], sizes = [2, 32], strides = [1, 1]} : vector<2x96xf32> to vector<2x32xf32>
    %141 = vector.extract_strided_slice %136 {offsets = [0, 64], sizes = [2, 32], strides = [1, 1]} : vector<2x96xf32> to vector<2x32xf32>
    %142 = arith.mulf %140, %101 : vector<2x32xf32>
    %143 = arith.mulf %139, %138 : vector<2x32xf32>
    %144 = arith.addf %142, %143 : vector<2x32xf32>
    %145 = math.tanh %144 : vector<2x32xf32>
    %146 = arith.mulf %141, %145 : vector<2x32xf32>
    %147 = vector.extract_strided_slice %0 {offsets = [0, 3], sizes = [2, 1], strides = [1, 1]} : vector<2x8xi32> to vector<2x1xi32>
    %c0_i32_29 = arith.constant 0 : i32
    %148 = vector.broadcast %c0_i32_29 : i32 to vector<2x1xi32>
    %149 = arith.cmpi ne, %147, %148 : vector<2x1xi32>
    %150 = vector.shape_cast %149 : vector<2x1xi1> to vector<2x1xi1>
    %151 = vector.broadcast %150 : vector<2x1xi1> to vector<2x128xi1>
    %152 = arith.select %151, %6, %3 : vector<2x128xi1>, vector<2x128xf32>
    %cst_30 = arith.constant dense<0.000000e+00> : vector<2x128xf32>
    %153 = tpu.matmul %127, %7, %cst_30 {dimension_numbers = #tpu.dot_dimension_numbers<[1], [0], [0], [1], [0, 0, 1, 1], [], []>} : vector<2x32xf32>, vector<32x128xf32>, vector<2x128xf32> -> vector<2x128xf32>
    %154 = arith.addf %152, %153 : vector<2x128xf32>
    %155 = vector.extract_strided_slice %154 {offsets = [0, 0], sizes = [2, 96], strides = [1, 1]} : vector<2x128xf32> to vector<2x96xf32>
    %156 = arith.negf %155 : vector<2x96xf32>
    %157 = math.exp %156 : vector<2x96xf32>
    %cst_31 = arith.constant 1.000000e+00 : f32
    %158 = vector.broadcast %cst_31 : f32 to vector<2x96xf32>
    %159 = arith.addf %158, %157 : vector<2x96xf32>
    %160 = arith.divf %158, %159 : vector<2x96xf32>
    %161 = vector.extract_strided_slice %154 {offsets = [0, 96], sizes = [2, 32], strides = [1, 1]} : vector<2x128xf32> to vector<2x32xf32>
    %162 = math.tanh %161 : vector<2x32xf32>
    %163 = vector.extract_strided_slice %160 {offsets = [0, 0], sizes = [2, 32], strides = [1, 1]} : vector<2x96xf32> to vector<2x32xf32>
    %164 = vector.extract_strided_slice %160 {offsets = [0, 32], sizes = [2, 32], strides = [1, 1]} : vector<2x96xf32> to vector<2x32xf32>
    %165 = vector.extract_strided_slice %160 {offsets = [0, 64], sizes = [2, 32], strides = [1, 1]} : vector<2x96xf32> to vector<2x32xf32>
    %166 = arith.mulf %164, %125 : vector<2x32xf32>
    %167 = arith.mulf %163, %162 : vector<2x32xf32>
    %168 = arith.addf %166, %167 : vector<2x32xf32>
    %169 = math.tanh %168 : vector<2x32xf32>
    %170 = arith.mulf %165, %169 : vector<2x32xf32>
    %171 = tpu.concatenate %170, %146 in 1 : vector<2x32xf32>, vector<2x32xf32> -> vector<2x64xf32>
    %cst_32 = arith.constant dense<0.000000e+00> : vector<2x128xf32>
    %172 = tpu.matmul %171, %9, %cst_32 {dimension_numbers = #tpu.dot_dimension_numbers<[1], [0], [0], [1], [0, 0, 1, 1], [], []>} : vector<2x64xf32>, vector<64x128xf32>, vector<2x128xf32> -> vector<2x128xf32>
    %173 = arith.addf %172, %13 : vector<2x128xf32>
    %174 = vector.extract_strided_slice %173 {offsets = [0, 0], sizes = [2, 96], strides = [1, 1]} : vector<2x128xf32> to vector<2x96xf32>
    %175 = arith.negf %174 : vector<2x96xf32>
    %176 = math.exp %175 : vector<2x96xf32>
    %cst_33 = arith.constant 1.000000e+00 : f32
    %177 = vector.broadcast %cst_33 : f32 to vector<2x96xf32>
    %178 = arith.addf %177, %176 : vector<2x96xf32>
    %179 = arith.divf %177, %178 : vector<2x96xf32>
    %180 = vector.extract_strided_slice %173 {offsets = [0, 96], sizes = [2, 32], strides = [1, 1]} : vector<2x128xf32> to vector<2x32xf32>
    %181 = math.tanh %180 : vector<2x32xf32>
    %182 = vector.extract_strided_slice %179 {offsets = [0, 0], sizes = [2, 32], strides = [1, 1]} : vector<2x96xf32> to vector<2x32xf32>
    %183 = vector.extract_strided_slice %179 {offsets = [0, 32], sizes = [2, 32], strides = [1, 1]} : vector<2x96xf32> to vector<2x32xf32>
    %184 = vector.extract_strided_slice %179 {offsets = [0, 64], sizes = [2, 32], strides = [1, 1]} : vector<2x96xf32> to vector<2x32xf32>
    %185 = arith.mulf %183, %144 : vector<2x32xf32>
    %186 = arith.mulf %182, %181 : vector<2x32xf32>
    %187 = arith.addf %185, %186 : vector<2x32xf32>
    %188 = math.tanh %187 : vector<2x32xf32>
    %189 = arith.mulf %184, %188 : vector<2x32xf32>
    %190 = vector.extract_strided_slice %0 {offsets = [0, 4], sizes = [2, 1], strides = [1, 1]} : vector<2x8xi32> to vector<2x1xi32>
    %c0_i32_34 = arith.constant 0 : i32
    %191 = vector.broadcast %c0_i32_34 : i32 to vector<2x1xi32>
    %192 = arith.cmpi ne, %190, %191 : vector<2x1xi32>
    %193 = vector.shape_cast %192 : vector<2x1xi1> to vector<2x1xi1>
    %194 = vector.broadcast %193 : vector<2x1xi1> to vector<2x128xi1>
    %195 = arith.select %194, %6, %3 : vector<2x128xi1>, vector<2x128xf32>
    %cst_35 = arith.constant dense<0.000000e+00> : vector<2x128xf32>
    %196 = tpu.matmul %170, %7, %cst_35 {dimension_numbers = #tpu.dot_dimension_numbers<[1], [0], [0], [1], [0, 0, 1, 1], [], []>} : vector<2x32xf32>, vector<32x128xf32>, vector<2x128xf32> -> vector<2x128xf32>
    %197 = arith.addf %195, %196 : vector<2x128xf32>
    %198 = vector.extract_strided_slice %197 {offsets = [0, 0], sizes = [2, 96], strides = [1, 1]} : vector<2x128xf32> to vector<2x96xf32>
    %199 = arith.negf %198 : vector<2x96xf32>
    %200 = math.exp %199 : vector<2x96xf32>
    %cst_36 = arith.constant 1.000000e+00 : f32
    %201 = vector.broadcast %cst_36 : f32 to vector<2x96xf32>
    %202 = arith.addf %201, %200 : vector<2x96xf32>
    %203 = arith.divf %201, %202 : vector<2x96xf32>
    %204 = vector.extract_strided_slice %197 {offsets = [0, 96], sizes = [2, 32], strides = [1, 1]} : vector<2x128xf32> to vector<2x32xf32>
    %205 = math.tanh %204 : vector<2x32xf32>
    %206 = vector.extract_strided_slice %203 {offsets = [0, 0], sizes = [2, 32], strides = [1, 1]} : vector<2x96xf32> to vector<2x32xf32>
    %207 = vector.extract_strided_slice %203 {offsets = [0, 32], sizes = [2, 32], strides = [1, 1]} : vector<2x96xf32> to vector<2x32xf32>
    %208 = vector.extract_strided_slice %203 {offsets = [0, 64], sizes = [2, 32], strides = [1, 1]} : vector<2x96xf32> to vector<2x32xf32>
    %209 = arith.mulf %207, %168 : vector<2x32xf32>
    %210 = arith.mulf %206, %205 : vector<2x32xf32>
    %211 = arith.addf %209, %210 : vector<2x32xf32>
    %212 = math.tanh %211 : vector<2x32xf32>
    %213 = arith.mulf %208, %212 : vector<2x32xf32>
    %214 = tpu.concatenate %213, %189 in 1 : vector<2x32xf32>, vector<2x32xf32> -> vector<2x64xf32>
    %cst_37 = arith.constant dense<0.000000e+00> : vector<2x128xf32>
    %215 = tpu.matmul %214, %9, %cst_37 {dimension_numbers = #tpu.dot_dimension_numbers<[1], [0], [0], [1], [0, 0, 1, 1], [], []>} : vector<2x64xf32>, vector<64x128xf32>, vector<2x128xf32> -> vector<2x128xf32>
    %216 = arith.addf %215, %13 : vector<2x128xf32>
    %217 = vector.extract_strided_slice %216 {offsets = [0, 0], sizes = [2, 96], strides = [1, 1]} : vector<2x128xf32> to vector<2x96xf32>
    %218 = arith.negf %217 : vector<2x96xf32>
    %219 = math.exp %218 : vector<2x96xf32>
    %cst_38 = arith.constant 1.000000e+00 : f32
    %220 = vector.broadcast %cst_38 : f32 to vector<2x96xf32>
    %221 = arith.addf %220, %219 : vector<2x96xf32>
    %222 = arith.divf %220, %221 : vector<2x96xf32>
    %223 = vector.extract_strided_slice %216 {offsets = [0, 96], sizes = [2, 32], strides = [1, 1]} : vector<2x128xf32> to vector<2x32xf32>
    %224 = math.tanh %223 : vector<2x32xf32>
    %225 = vector.extract_strided_slice %222 {offsets = [0, 0], sizes = [2, 32], strides = [1, 1]} : vector<2x96xf32> to vector<2x32xf32>
    %226 = vector.extract_strided_slice %222 {offsets = [0, 32], sizes = [2, 32], strides = [1, 1]} : vector<2x96xf32> to vector<2x32xf32>
    %227 = vector.extract_strided_slice %222 {offsets = [0, 64], sizes = [2, 32], strides = [1, 1]} : vector<2x96xf32> to vector<2x32xf32>
    %228 = arith.mulf %226, %187 : vector<2x32xf32>
    %229 = arith.mulf %225, %224 : vector<2x32xf32>
    %230 = arith.addf %228, %229 : vector<2x32xf32>
    %231 = math.tanh %230 : vector<2x32xf32>
    %232 = arith.mulf %227, %231 : vector<2x32xf32>
    %233 = vector.extract_strided_slice %0 {offsets = [0, 5], sizes = [2, 1], strides = [1, 1]} : vector<2x8xi32> to vector<2x1xi32>
    %c0_i32_39 = arith.constant 0 : i32
    %234 = vector.broadcast %c0_i32_39 : i32 to vector<2x1xi32>
    %235 = arith.cmpi ne, %233, %234 : vector<2x1xi32>
    %236 = vector.shape_cast %235 : vector<2x1xi1> to vector<2x1xi1>
    %237 = vector.broadcast %236 : vector<2x1xi1> to vector<2x128xi1>
    %238 = arith.select %237, %6, %3 : vector<2x128xi1>, vector<2x128xf32>
    %cst_40 = arith.constant dense<0.000000e+00> : vector<2x128xf32>
    %239 = tpu.matmul %213, %7, %cst_40 {dimension_numbers = #tpu.dot_dimension_numbers<[1], [0], [0], [1], [0, 0, 1, 1], [], []>} : vector<2x32xf32>, vector<32x128xf32>, vector<2x128xf32> -> vector<2x128xf32>
    %240 = arith.addf %238, %239 : vector<2x128xf32>
    %241 = vector.extract_strided_slice %240 {offsets = [0, 0], sizes = [2, 96], strides = [1, 1]} : vector<2x128xf32> to vector<2x96xf32>
    %242 = arith.negf %241 : vector<2x96xf32>
    %243 = math.exp %242 : vector<2x96xf32>
    %cst_41 = arith.constant 1.000000e+00 : f32
    %244 = vector.broadcast %cst_41 : f32 to vector<2x96xf32>
    %245 = arith.addf %244, %243 : vector<2x96xf32>
    %246 = arith.divf %244, %245 : vector<2x96xf32>
    %247 = vector.extract_strided_slice %240 {offsets = [0, 96], sizes = [2, 32], strides = [1, 1]} : vector<2x128xf32> to vector<2x32xf32>
    %248 = math.tanh %247 : vector<2x32xf32>
    %249 = vector.extract_strided_slice %246 {offsets = [0, 0], sizes = [2, 32], strides = [1, 1]} : vector<2x96xf32> to vector<2x32xf32>
    %250 = vector.extract_strided_slice %246 {offsets = [0, 32], sizes = [2, 32], strides = [1, 1]} : vector<2x96xf32> to vector<2x32xf32>
    %251 = vector.extract_strided_slice %246 {offsets = [0, 64], sizes = [2, 32], strides = [1, 1]} : vector<2x96xf32> to vector<2x32xf32>
    %252 = arith.mulf %250, %211 : vector<2x32xf32>
    %253 = arith.mulf %249, %248 : vector<2x32xf32>
    %254 = arith.addf %252, %253 : vector<2x32xf32>
    %255 = math.tanh %254 : vector<2x32xf32>
    %256 = arith.mulf %251, %255 : vector<2x32xf32>
    %257 = tpu.concatenate %256, %232 in 1 : vector<2x32xf32>, vector<2x32xf32> -> vector<2x64xf32>
    %cst_42 = arith.constant dense<0.000000e+00> : vector<2x128xf32>
    %258 = tpu.matmul %257, %9, %cst_42 {dimension_numbers = #tpu.dot_dimension_numbers<[1], [0], [0], [1], [0, 0, 1, 1], [], []>} : vector<2x64xf32>, vector<64x128xf32>, vector<2x128xf32> -> vector<2x128xf32>
    %259 = arith.addf %258, %13 : vector<2x128xf32>
    %260 = vector.extract_strided_slice %259 {offsets = [0, 0], sizes = [2, 96], strides = [1, 1]} : vector<2x128xf32> to vector<2x96xf32>
    %261 = arith.negf %260 : vector<2x96xf32>
    %262 = math.exp %261 : vector<2x96xf32>
    %cst_43 = arith.constant 1.000000e+00 : f32
    %263 = vector.broadcast %cst_43 : f32 to vector<2x96xf32>
    %264 = arith.addf %263, %262 : vector<2x96xf32>
    %265 = arith.divf %263, %264 : vector<2x96xf32>
    %266 = vector.extract_strided_slice %259 {offsets = [0, 96], sizes = [2, 32], strides = [1, 1]} : vector<2x128xf32> to vector<2x32xf32>
    %267 = math.tanh %266 : vector<2x32xf32>
    %268 = vector.extract_strided_slice %265 {offsets = [0, 0], sizes = [2, 32], strides = [1, 1]} : vector<2x96xf32> to vector<2x32xf32>
    %269 = vector.extract_strided_slice %265 {offsets = [0, 32], sizes = [2, 32], strides = [1, 1]} : vector<2x96xf32> to vector<2x32xf32>
    %270 = vector.extract_strided_slice %265 {offsets = [0, 64], sizes = [2, 32], strides = [1, 1]} : vector<2x96xf32> to vector<2x32xf32>
    %271 = arith.mulf %269, %230 : vector<2x32xf32>
    %272 = arith.mulf %268, %267 : vector<2x32xf32>
    %273 = arith.addf %271, %272 : vector<2x32xf32>
    %274 = math.tanh %273 : vector<2x32xf32>
    %275 = arith.mulf %270, %274 : vector<2x32xf32>
    %276 = vector.extract_strided_slice %0 {offsets = [0, 6], sizes = [2, 1], strides = [1, 1]} : vector<2x8xi32> to vector<2x1xi32>
    %c0_i32_44 = arith.constant 0 : i32
    %277 = vector.broadcast %c0_i32_44 : i32 to vector<2x1xi32>
    %278 = arith.cmpi ne, %276, %277 : vector<2x1xi32>
    %279 = vector.shape_cast %278 : vector<2x1xi1> to vector<2x1xi1>
    %280 = vector.broadcast %279 : vector<2x1xi1> to vector<2x128xi1>
    %281 = arith.select %280, %6, %3 : vector<2x128xi1>, vector<2x128xf32>
    %cst_45 = arith.constant dense<0.000000e+00> : vector<2x128xf32>
    %282 = tpu.matmul %256, %7, %cst_45 {dimension_numbers = #tpu.dot_dimension_numbers<[1], [0], [0], [1], [0, 0, 1, 1], [], []>} : vector<2x32xf32>, vector<32x128xf32>, vector<2x128xf32> -> vector<2x128xf32>
    %283 = arith.addf %281, %282 : vector<2x128xf32>
    %284 = vector.extract_strided_slice %283 {offsets = [0, 0], sizes = [2, 96], strides = [1, 1]} : vector<2x128xf32> to vector<2x96xf32>
    %285 = arith.negf %284 : vector<2x96xf32>
    %286 = math.exp %285 : vector<2x96xf32>
    %cst_46 = arith.constant 1.000000e+00 : f32
    %287 = vector.broadcast %cst_46 : f32 to vector<2x96xf32>
    %288 = arith.addf %287, %286 : vector<2x96xf32>
    %289 = arith.divf %287, %288 : vector<2x96xf32>
    %290 = vector.extract_strided_slice %283 {offsets = [0, 96], sizes = [2, 32], strides = [1, 1]} : vector<2x128xf32> to vector<2x32xf32>
    %291 = math.tanh %290 : vector<2x32xf32>
    %292 = vector.extract_strided_slice %289 {offsets = [0, 0], sizes = [2, 32], strides = [1, 1]} : vector<2x96xf32> to vector<2x32xf32>
    %293 = vector.extract_strided_slice %289 {offsets = [0, 32], sizes = [2, 32], strides = [1, 1]} : vector<2x96xf32> to vector<2x32xf32>
    %294 = vector.extract_strided_slice %289 {offsets = [0, 64], sizes = [2, 32], strides = [1, 1]} : vector<2x96xf32> to vector<2x32xf32>
    %295 = arith.mulf %293, %254 : vector<2x32xf32>
    %296 = arith.mulf %292, %291 : vector<2x32xf32>
    %297 = arith.addf %295, %296 : vector<2x32xf32>
    %298 = math.tanh %297 : vector<2x32xf32>
    %299 = arith.mulf %294, %298 : vector<2x32xf32>
    %300 = tpu.concatenate %299, %275 in 1 : vector<2x32xf32>, vector<2x32xf32> -> vector<2x64xf32>
    %cst_47 = arith.constant dense<0.000000e+00> : vector<2x128xf32>
    %301 = tpu.matmul %300, %9, %cst_47 {dimension_numbers = #tpu.dot_dimension_numbers<[1], [0], [0], [1], [0, 0, 1, 1], [], []>} : vector<2x64xf32>, vector<64x128xf32>, vector<2x128xf32> -> vector<2x128xf32>
    %302 = arith.addf %301, %13 : vector<2x128xf32>
    %303 = vector.extract_strided_slice %302 {offsets = [0, 0], sizes = [2, 96], strides = [1, 1]} : vector<2x128xf32> to vector<2x96xf32>
    %304 = arith.negf %303 : vector<2x96xf32>
    %305 = math.exp %304 : vector<2x96xf32>
    %cst_48 = arith.constant 1.000000e+00 : f32
    %306 = vector.broadcast %cst_48 : f32 to vector<2x96xf32>
    %307 = arith.addf %306, %305 : vector<2x96xf32>
    %308 = arith.divf %306, %307 : vector<2x96xf32>
    %309 = vector.extract_strided_slice %302 {offsets = [0, 96], sizes = [2, 32], strides = [1, 1]} : vector<2x128xf32> to vector<2x32xf32>
    %310 = math.tanh %309 : vector<2x32xf32>
    %311 = vector.extract_strided_slice %308 {offsets = [0, 0], sizes = [2, 32], strides = [1, 1]} : vector<2x96xf32> to vector<2x32xf32>
    %312 = vector.extract_strided_slice %308 {offsets = [0, 32], sizes = [2, 32], strides = [1, 1]} : vector<2x96xf32> to vector<2x32xf32>
    %313 = vector.extract_strided_slice %308 {offsets = [0, 64], sizes = [2, 32], strides = [1, 1]} : vector<2x96xf32> to vector<2x32xf32>
    %314 = arith.mulf %312, %273 : vector<2x32xf32>
    %315 = arith.mulf %311, %310 : vector<2x32xf32>
    %316 = arith.addf %314, %315 : vector<2x32xf32>
    %317 = math.tanh %316 : vector<2x32xf32>
    %318 = arith.mulf %313, %317 : vector<2x32xf32>
    %319 = vector.extract_strided_slice %0 {offsets = [0, 7], sizes = [2, 1], strides = [1, 1]} : vector<2x8xi32> to vector<2x1xi32>
    %c0_i32_49 = arith.constant 0 : i32
    %320 = vector.broadcast %c0_i32_49 : i32 to vector<2x1xi32>
    %321 = arith.cmpi ne, %319, %320 : vector<2x1xi32>
    %322 = vector.shape_cast %321 : vector<2x1xi1> to vector<2x1xi1>
    %323 = vector.broadcast %322 : vector<2x1xi1> to vector<2x128xi1>
    %324 = arith.select %323, %6, %3 : vector<2x128xi1>, vector<2x128xf32>
    %cst_50 = arith.constant dense<0.000000e+00> : vector<2x128xf32>
    %325 = tpu.matmul %299, %7, %cst_50 {dimension_numbers = #tpu.dot_dimension_numbers<[1], [0], [0], [1], [0, 0, 1, 1], [], []>} : vector<2x32xf32>, vector<32x128xf32>, vector<2x128xf32> -> vector<2x128xf32>
    %326 = arith.addf %324, %325 : vector<2x128xf32>
    %327 = vector.extract_strided_slice %326 {offsets = [0, 0], sizes = [2, 96], strides = [1, 1]} : vector<2x128xf32> to vector<2x96xf32>
    %328 = arith.negf %327 : vector<2x96xf32>
    %329 = math.exp %328 : vector<2x96xf32>
    %cst_51 = arith.constant 1.000000e+00 : f32
    %330 = vector.broadcast %cst_51 : f32 to vector<2x96xf32>
    %331 = arith.addf %330, %329 : vector<2x96xf32>
    %332 = arith.divf %330, %331 : vector<2x96xf32>
    %333 = vector.extract_strided_slice %326 {offsets = [0, 96], sizes = [2, 32], strides = [1, 1]} : vector<2x128xf32> to vector<2x32xf32>
    %334 = math.tanh %333 : vector<2x32xf32>
    %335 = vector.extract_strided_slice %332 {offsets = [0, 0], sizes = [2, 32], strides = [1, 1]} : vector<2x96xf32> to vector<2x32xf32>
    %336 = vector.extract_strided_slice %332 {offsets = [0, 32], sizes = [2, 32], strides = [1, 1]} : vector<2x96xf32> to vector<2x32xf32>
    %337 = vector.extract_strided_slice %332 {offsets = [0, 64], sizes = [2, 32], strides = [1, 1]} : vector<2x96xf32> to vector<2x32xf32>
    %338 = arith.mulf %336, %297 : vector<2x32xf32>
    %339 = arith.mulf %335, %334 : vector<2x32xf32>
    %340 = arith.addf %338, %339 : vector<2x32xf32>
    %341 = math.tanh %340 : vector<2x32xf32>
    %342 = arith.mulf %337, %341 : vector<2x32xf32>
    %343 = tpu.concatenate %342, %318 in 1 : vector<2x32xf32>, vector<2x32xf32> -> vector<2x64xf32>
    %cst_52 = arith.constant dense<0.000000e+00> : vector<2x128xf32>
    %344 = tpu.matmul %343, %9, %cst_52 {dimension_numbers = #tpu.dot_dimension_numbers<[1], [0], [0], [1], [0, 0, 1, 1], [], []>} : vector<2x64xf32>, vector<64x128xf32>, vector<2x128xf32> -> vector<2x128xf32>
    %345 = arith.addf %344, %13 : vector<2x128xf32>
    %346 = vector.extract_strided_slice %345 {offsets = [0, 0], sizes = [2, 96], strides = [1, 1]} : vector<2x128xf32> to vector<2x96xf32>
    %347 = arith.negf %346 : vector<2x96xf32>
    %348 = math.exp %347 : vector<2x96xf32>
    %cst_53 = arith.constant 1.000000e+00 : f32
    %349 = vector.broadcast %cst_53 : f32 to vector<2x96xf32>
    %350 = arith.addf %349, %348 : vector<2x96xf32>
    %351 = arith.divf %349, %350 : vector<2x96xf32>
    %352 = vector.extract_strided_slice %345 {offsets = [0, 96], sizes = [2, 32], strides = [1, 1]} : vector<2x128xf32> to vector<2x32xf32>
    %353 = math.tanh %352 : vector<2x32xf32>
    %354 = vector.extract_strided_slice %351 {offsets = [0, 0], sizes = [2, 32], strides = [1, 1]} : vector<2x96xf32> to vector<2x32xf32>
    %355 = vector.extract_strided_slice %351 {offsets = [0, 32], sizes = [2, 32], strides = [1, 1]} : vector<2x96xf32> to vector<2x32xf32>
    %356 = vector.extract_strided_slice %351 {offsets = [0, 64], sizes = [2, 32], strides = [1, 1]} : vector<2x96xf32> to vector<2x32xf32>
    %357 = arith.mulf %355, %316 : vector<2x32xf32>
    %358 = arith.mulf %354, %353 : vector<2x32xf32>
    %359 = arith.addf %357, %358 : vector<2x32xf32>
    %360 = math.tanh %359 : vector<2x32xf32>
    %361 = arith.mulf %356, %360 : vector<2x32xf32>
    %c0_54 = arith.constant 0 : index
    %c0_55 = arith.constant 0 : index
    %362 = vector.load %arg5[%c0_54, %c0_55] : memref<1x32xf32, #tpu.memory_space<vmem>>, vector<1x32xf32>
    %363 = vector.broadcast %362 : vector<1x32xf32> to vector<2x32xf32>
    %364 = arith.mulf %361, %363 : vector<2x32xf32>
    %cst_56 = arith.constant dense<0.000000e+00> : vector<2xf32>
    %365 = vector.multi_reduction <add>, %364, %cst_56 [1] : vector<2x32xf32> to vector<2xf32>
    %366 = vector.shape_cast %365 : vector<2xf32> to vector<2x1xf32>
    %c0_57 = arith.constant 0 : index
    %c0_58 = arith.constant 0 : index
    %367 = vector.load %arg6[%c0_57, %c0_58] : memref<2x1xf32, #tpu.memory_space<vmem>>, vector<2x1xf32>
    tpu.vector_store %arg6[%c0_57, %c0_58], %366 {strides = array<i32>} : memref<2x1xf32, #tpu.memory_space<vmem>>, vector<2x1xf32>,
    return
  }
}

</mosaic_0001>

<llo_original>
// kernel: tpu_custom_call.1
$region0: #{tpu_custom_call.1}
  #allocation0 [shape = 'u32[]', space=smem, size = 0x4, offset = 0x4, fixed_abs, tag = 'smem constant byte address 0x4 - core index']
  #allocation1 [shape = 'u32[144,128]{1,0:T(1,128)}', space=vmem, size = 0x12000, scoped, tag = 'internal scratch']
  %s0 = inlined_call_operand.hbm [shape: s32[2,8], index: 0, kind: input, shape index: {}]
  %s1 = inlined_call_operand.vmem [shape: f32[2,128], index: 1, kind: input, shape index: {}]
  %s2 = inlined_call_operand.hbm [shape: f32[32,128], index: 2, kind: input, shape index: {}]
  %s3 = inlined_call_operand.hbm [shape: f32[1,64,128], index: 3, kind: input, shape index: {}]
  %s4 = inlined_call_operand.vmem [shape: f32[1,1,128], index: 4, kind: input, shape index: {}]
  %s5 = inlined_call_operand.vmem [shape: f32[1,32], index: 5, kind: input, shape index: {}]
  %s6 = inlined_call_operand.vmem [shape: f32[2,1], index: 6, kind: output, shape index: {}]
  %s7 = sld [smem:[#allocation0]]
  $region46: #{tpu_custom_call.1} parent=0
    _
  %s9 = ssub.s32 1, %s7
  %s10 = scalar_select 0, %s9, %s7
  $region1: #{tpu_custom_call.1} parent=0
    #allocation2 [shape = 'u8[1024]{0}', space=vmem, size = 0x400, scoped, tag = 'input window, operand 0, single buffered']
    #allocation3 [shape = 's32[1]{0}', space=sflag, size = 0x4, scoped, tag = 'scoped memory for tpu_custom_call.1']
    #allocation4 [shape = 'u8[16384]{0}', space=vmem, size = 0x4000, scoped, tag = 'input window, operand 2, single buffered']
    #allocation5 [shape = 's32[1]{0}', space=sflag, size = 0x4, scoped, tag = 'scoped memory for tpu_custom_call.1']
    #allocation6 [shape = 'u8[32768]{0}', space=vmem, size = 0x8000, scoped, tag = 'input window, operand 3, single buffered']
    %11 = vsyncpa [#allocation3], 0
    %12 = vsyncpa [#allocation5], 0
    // Predicated region
    $region2: #{tpu_custom_call.1} parent=1 // pred_check
      _
    $region3: #{tpu_custom_call.1} parent=1 // pred_check_branch
      %14 = sbr.rel (0) target = $region5
    $region4: #{tpu_custom_call.1} parent=1 // pred_region
      %s16 = ssub.s32 32, 32
      %17 = vsyncadd [#allocation3], %s16
      %s19 = sshll.u32 [#allocation2], 4
      %s20 = int_to_ptr.vmem [resolvable:$true] %s19
      %22 = dma.hbm_to_vmem [thread:$0]  %s0, 32, %s20, [#allocation3]
    $region5: #{tpu_custom_call.1} parent=1 // pred_fallthru
      _
    // Predicated region
    $region6: #{tpu_custom_call.1} parent=1 // pred_check
      _
    $region7: #{tpu_custom_call.1} parent=1 // pred_check_branch
      %24 = sbr.rel (0) target = $region9
    $region8: #{tpu_custom_call.1} parent=1 // pred_region
      _
    $region9: #{tpu_custom_call.1} parent=1 // pred_fallthru
      _
    // Predicated region
    $region10: #{tpu_custom_call.1} parent=1 // pred_check
      _
    $region11: #{tpu_custom_call.1} parent=1 // pred_check_branch
      %26 = sbr.rel (0) target = $region13
    $region12: #{tpu_custom_call.1} parent=1 // pred_region
      %s28 = ssub.s32 512, 512
      %29 = vsyncadd [#allocation5], %s28
      %s30 = sshll.u32 [#allocation4], 4
      %s31 = int_to_ptr.vmem [resolvable:$true] %s30
      %36 = dma.hbm_to_vmem [thread:$0]  %s2, 512, %s31, [#allocation5], 128, 128, 8
    $region13: #{tpu_custom_call.1} parent=1 // pred_fallthru
      _
    // Predicated region
    $region14: #{tpu_custom_call.1} parent=1 // pred_check
      _
    $region15: #{tpu_custom_call.1} parent=1 // pred_check_branch
      %38 = sbr.rel (0) target = $region17
    $region16: #{tpu_custom_call.1} parent=1 // pred_region
      %s40 = ssub.s32 1024, 1024
      %41 = vsyncadd [#allocation5], %s40
      %s42 = sshll.u32 [#allocation6], 4
      %s43 = int_to_ptr.vmem [resolvable:$true] %s42
      %48 = dma.hbm_to_vmem [thread:$0]  %s3, 1024, %s43, [#allocation5], 128, 128, 8
    $region17: #{tpu_custom_call.1} parent=1 // pred_fallthru
      _
    // Predicated region
    $region18: #{tpu_custom_call.1} parent=1 // pred_check
      _
    $region19: #{tpu_custom_call.1} parent=1 // pred_check_branch
      %50 = sbr.rel (0) target = $region21
    $region20: #{tpu_custom_call.1} parent=1 // pred_region
      _
    $region21: #{tpu_custom_call.1} parent=1 // pred_fallthru
      _
    // Predicated region
    $region22: #{tpu_custom_call.1} parent=1 // pred_check
      _
    $region23: #{tpu_custom_call.1} parent=1 // pred_check_branch
      %52 = sbr.rel (0) target = $region25
    $region24: #{tpu_custom_call.1} parent=1 // pred_region
      _
    $region25: #{tpu_custom_call.1} parent=1 // pred_fallthru
      _
    // Predicated region
    $region26: #{tpu_custom_call.1} parent=1 // pred_check
      _
    $region27: #{tpu_custom_call.1} parent=1 // pred_check_branch
      %54 = sbr.rel (0) target = $region29
    $region28: #{tpu_custom_call.1} parent=1 // pred_region
      %55 = dma.done [#allocation3], 32
    $region29: #{tpu_custom_call.1} parent=1 // pred_fallthru
      _
    // Predicated region
    $region30: #{tpu_custom_call.1} parent=1 // pred_check
      _
    $region31: #{tpu_custom_call.1} parent=1 // pred_check_branch
      %57 = sbr.rel (0) target = $region33
    $region32: #{tpu_custom_call.1} parent=1 // pred_region
      %58 = dma.done [#allocation5], 512
    $region33: #{tpu_custom_call.1} parent=1 // pred_fallthru
      _
    // Predicated region
    $region34: #{tpu_custom_call.1} parent=1 // pred_check
      _
    $region35: #{tpu_custom_call.1} parent=1 // pred_check_branch
      %60 = sbr.rel (0) target = $region37
    $region36: #{tpu_custom_call.1} parent=1 // pred_region
      %61 = dma.done [#allocation5], 1024
    $region37: #{tpu_custom_call.1} parent=1 // pred_fallthru
      _
    %v62 = vld [vmem:[#allocation2] sm:$0x3]
    %v63 = vld [vmem:[%s1] sm:$0x1]
    %v64 = vlaneseq
    %v65 = vshrl.u32 %v64, 7
    %v66 = vsub.s32 0, %v65
    %v67 = vrot.slane %v63, %v66
    %v68 = vld [vmem:[%s1 + $0x1] sm:$0x1]
    %v69 = vlaneseq
    %v70 = vshrl.u32 %v69, 7
    %v71 = vsub.s32 0, %v70
    %v72 = vrot.slane %v68, %v71
    %v73 = vld [vmem:[#allocation4] sm:$0xff]
    %v74 = vld [vmem:[#allocation4 + $0x8] sm:$0xff]
    %v75 = vld [vmem:[#allocation4 + $0x10] sm:$0xff]
    %v76 = vld [vmem:[#allocation4 + $0x18] sm:$0xff]
    %v77 = vld [vmem:[#allocation6] sm:$0xff]
    %v78 = vld [vmem:[#allocation6 + $0x8] sm:$0xff]
    %v79 = vld [vmem:[#allocation6 + $0x10] sm:$0xff]
    %v80 = vld [vmem:[#allocation6 + $0x18] sm:$0xff]
    %v81 = vld [vmem:[#allocation6 + $0x20] sm:$0xff]
    %v82 = vld [vmem:[#allocation6 + $0x28] sm:$0xff]
    %v83 = vld [vmem:[#allocation6 + $0x30] sm:$0xff]
    %v84 = vld [vmem:[#allocation6 + $0x38] sm:$0xff]
    %v85 = vld [vmem:[%s4] sm:$0x1]
    %v87 = vlaneseq
    %v88 = vshrl.u32 %v87, 7
    %v89 = vsub.s32 0, %v88
    %v90 = vrot.slane %v85, %v89
    %vm92 = vcmp.ne.s32.totalorder %v62, 0
    %v93 = vsel %vm92, 1, 0
    %94 = vset.pattern.permute.xlu0 0
    %95 = vperm.xlu0 %94, %v93
    %v96 = vpop.permute.xlu0 %95
    %vm97 = vcmp.eq.s32.totalorder %v96, 1
    %v98 = vsel %vm97, %v72, %v67
    %vm99 = vcmask 261120
    %v101 = vsel %vm99, 0.0, 0
    %103 = vmatprep.subr.mxu0 0.0
    %104 = vmatpush1.msra.mxu0 %v73
    %105 = vmatprep.subr.mxu0 0.0
    %106 = vmatpush1.msra.mxu0 %v74
    %107 = vmatprep.subr.mxu0 0.0
    %108 = vmatpush1.msra.mxu0 %v75
    %109 = vmatprep.subr.mxu0 0.0
    %110 = vmatpush1.msra.mxu0 %v76
    %111 = vmatprep.subr.mxu0 0.0
    %112 = vmatpush1.msra.mxu0 0.0
    %113 = vmatprep.subr.mxu0 0.0
    %114 = vmatpush1.msra.mxu0 0.0
    %115 = vmatprep.subr.mxu0 0.0
    %116 = vmatpush1.msra.mxu0 0.0
    %117 = vmatprep.subr.mxu0 0.0
    %118 = vmatpush1.msra.mxu0 0.0
    %119 = vmatprep.subr.mxu0 0.0
    %120 = vmatpush1.msra.mxu0 0.0
    %121 = vmatprep.subr.mxu0 0.0
    %122 = vmatpush1.msra.mxu0 0.0
    %123 = vmatprep.subr.mxu0 0.0
    %124 = vmatpush1.msra.mxu0 0.0
    %125 = vmatprep.subr.mxu0 0.0
    %126 = vmatpush1.msra.mxu0 0.0
    %127 = vmatprep.subr.mxu0 0.0
    %128 = vmatpush1.msra.mxu0 0.0
    %129 = vmatprep.subr.mxu0 0.0
    %130 = vmatpush1.msra.mxu0 0.0
    %131 = vmatprep.subr.mxu0 0.0
    %132 = vmatpush1.msra.mxu0 0.0
    %133 = vmatprep.subr.mxu0 0.0
    %134 = vmatpush1.msra.mxu0 0.0
    %135 = vmatprep.subr.mxu0 0.0
    %136 = vmatpush1.msra.mxu0 0.0
    %137 = vmatprep.subr.mxu0 0.0
    %138 = vmatpush1.msra.mxu0 0.0
    %139 = vmatprep.subr.mxu0 0.0
    %140 = vmatpush1.msra.mxu0 0.0
    %141 = vmatprep.subr.mxu0 0.0
    %142 = vmatpush1.msra.mxu0 0.0
    %143 = vmatprep.subr.mxu0 0.0
    %144 = vmatpush1.msra.mxu0 0.0
    %145 = vmatprep.subr.mxu0 0.0
    %146 = vmatpush1.msra.mxu0 0.0
    %147 = vmatprep.subr.mxu0 0.0
    %148 = vmatpush1.msra.mxu0 0.0
    %149 = vmatprep.subr.mxu0 0.0
    %150 = vmatpush1.msra.mxu0 0.0
    %151 = vmatprep.subr.mxu0 0.0
    %152 = vmatpush1.msra.mxu0 0.0
    %153 = vmatprep.subr.mxu0 0.0
    %154 = vmatpush1.msra.mxu0 0.0
    %155 = vmatprep.subr.mxu0 0.0
    %156 = vmatpush1.msra.mxu0 0.0
    %157 = vmatprep.subr.mxu0 0.0
    %158 = vmatpush1.msra.mxu0 0.0
    %159 = vmatprep.subr.mxu0 0.0
    %160 = vmatpush1.msra.mxu0 0.0
    %161 = vmatprep.subr.mxu0 0.0
    %162 = vmatpush1.msra.mxu0 0.0
    %163 = vmatprep.subr.mxu0 0.0
    %164 = vmatpush1.msra.mxu0 0.0
    %165 = vmatprep.subr.mxu0 0.0
    %166 = vmatpush1.msra.mxu0 0.0
    %167 = vmatprep.mubr.f32.mxu0 0.0
    %168 = vmatmul.mubr.f32.gmra.mrb[0].mxu0 %v101
    %v169 = vpop.f32.mrb[0].mxu0
    %v170 = vadd.f32 0.0, %v169
    %v171 = vpop.f32.mrb[0].mxu0
    %172 = vdwg.mxu0
    %v173 = vadd.f32 %v98, %v170
    %v174 = vxor.u32 %v173, 2147483648
    %v175 = vmul.f32 %v174, 1.442695
    %v176 = vpow.pop %v175
    %v177 = vadd.f32 %v176, 1.0
    %v178 = vrcp.pop %v177
    %v179 = vmul.f32 1.0, %v178
    %v180 = vtanh.pop %v173
    %v181 = vmul.f32 %v179, 0.0
    %183 = vrot.lane.b32.xlu0 %v180, 32
    %v184 = vpop.permute.xlu0 %183
    %v186 = vmul.f32 %v179, %v184
    %188 = vrot.lane.b32.xlu0 %v186, 32
    %v189 = vpop.permute.xlu0 %188
    %v191 = vadd.f32 %v181, %v189
    %v192 = vtanh.pop %v191
    %194 = vrot.lane.b32.xlu0 %v192, 32
    %v195 = vpop.permute.xlu0 %194
    %v197 = vmul.f32 %v179, %v195
    %199 = vrot.lane.b32.xlu0 %v197, 64
    %v200 = vpop.permute.xlu0 %199
    %v202 = vsel %vm99, %v200, 0.0
    %vm203 = vcmask 523264
    %v205 = vsel %vm203, %v202, 0
    %207 = vmatprep.subr.mxu0 0.0
    %208 = vmatpush1.msra.mxu0 %v77
    %209 = vmatprep.subr.mxu0 0.0
    %210 = vmatpush1.msra.mxu0 %v78
    %211 = vmatprep.subr.mxu0 0.0
    %212 = vmatpush1.msra.mxu0 %v79
    %213 = vmatprep.subr.mxu0 0.0
    %214 = vmatpush1.msra.mxu0 %v80
    %215 = vmatprep.subr.mxu0 0.0
    %216 = vmatpush1.msra.mxu0 %v81
    %217 = vmatprep.subr.mxu0 0.0
    %218 = vmatpush1.msra.mxu0 %v82
    %219 = vmatprep.subr.mxu0 0.0
    %220 = vmatpush1.msra.mxu0 %v83
    %221 = vmatprep.subr.mxu0 0.0
    %222 = vmatpush1.msra.mxu0 %v84
    %223 = vmatprep.subr.mxu0 0.0
    %224 = vmatpush1.msra.mxu0 0.0
    %225 = vmatprep.subr.mxu0 0.0
    %226 = vmatpush1.msra.mxu0 0.0
    %227 = vmatprep.subr.mxu0 0.0
    %228 = vmatpush1.msra.mxu0 0.0
    %229 = vmatprep.subr.mxu0 0.0
    %230 = vmatpush1.msra.mxu0 0.0
    %231 = vmatprep.subr.mxu0 0.0
    %232 = vmatpush1.msra.mxu0 0.0
    %233 = vmatprep.subr.mxu0 0.0
    %234 = vmatpush1.msra.mxu0 0.0
    %235 = vmatprep.subr.mxu0 0.0
    %236 = vmatpush1.msra.mxu0 0.0
    %237 = vmatprep.subr.mxu0 0.0
    %238 = vmatpush1.msra.mxu0 0.0
    %239 = vmatprep.subr.mxu0 0.0
    %240 = vmatpush1.msra.mxu0 0.0
    %241 = vmatprep.subr.mxu0 0.0
    %242 = vmatpush1.msra.mxu0 0.0
    %243 = vmatprep.subr.mxu0 0.0
    %244 = vmatpush1.msra.mxu0 0.0
    %245 = vmatprep.subr.mxu0 0.0
    %246 = vmatpush1.msra.mxu0 0.0
    %247 = vmatprep.subr.mxu0 0.0
    %248 = vmatpush1.msra.mxu0 0.0
    %249 = vmatprep.subr.mxu0 0.0
    %250 = vmatpush1.msra.mxu0 0.0
    %251 = vmatprep.subr.mxu0 0.0
    %252 = vmatpush1.msra.mxu0 0.0
    %253 = vmatprep.subr.mxu0 0.0
    %254 = vmatpush1.msra.mxu0 0.0
    %255 = vmatprep.subr.mxu0 0.0
    %256 = vmatpush1.msra.mxu0 0.0
    %257 = vmatprep.subr.mxu0 0.0
    %258 = vmatpush1.msra.mxu0 0.0
    %259 = vmatprep.subr.mxu0 0.0
    %260 = vmatpush1.msra.mxu0 0.0
    %261 = vmatprep.subr.mxu0 0.0
    %262 = vmatpush1.msra.mxu0 0.0
    %263 = vmatprep.subr.mxu0 0.0
    %264 = vmatpush1.msra.mxu0 0.0
    %265 = vmatprep.subr.mxu0 0.0
    %266 = vmatpush1.msra.mxu0 0.0
    %267 = vmatprep.subr.mxu0 0.0
    %268 = vmatpush1.msra.mxu0 0.0
    %269 = vmatprep.subr.mxu0 0.0
    %270 = vmatpush1.msra.mxu0 0.0
    %271 = vmatprep.mubr.f32.mxu0 0.0
    %272 = vmatmul.mubr.f32.gmra.mrb[0].mxu0 %v205
    %v273 = vpop.f32.mrb[0].mxu0
    %v274 = vadd.f32 %v90, %v273
    %v275 = vpop.f32.mrb[0].mxu0
    %276 = vdwg.mxu0
    %v277 = vxor.u32 %v274, 2147483648
    %v278 = vmul.f32 %v277, 1.442695
    %v279 = vpow.pop %v278
    %v280 = vadd.f32 %v279, 1.0
    %v281 = vrcp.pop %v280
    %v282 = vmul.f32 1.0, %v281
    %v283 = vtanh.pop %v274
    %v284 = vmul.f32 %v282, 0.0
    %286 = vrot.lane.b32.xlu0 %v283, 32
    %v287 = vpop.permute.xlu0 %286
    %v289 = vmul.f32 %v282, %v287
    %291 = vrot.lane.b32.xlu0 %v289, 32
    %v292 = vpop.permute.xlu0 %291
    %v294 = vadd.f32 %v284, %v292
    %v295 = vtanh.pop %v294
    %297 = vrot.lane.b32.xlu0 %v295, 32
    %v298 = vpop.permute.xlu0 %297
    %v300 = vmul.f32 %v282, %v298
    %301 = vset.pattern.permute.xlu0 1
    %302 = vperm.xlu0 %301, %v93
    %v303 = vpop.permute.xlu0 %302
    %vm304 = vcmp.eq.s32.totalorder %v303, 1
    %v305 = vsel %vm304, %v72, %v67
    %v306 = vsel %vm99, %v200, 0
    %308 = vmatprep.subr.mxu0 0.0
    %309 = vmatpush1.msra.mxu0 %v73
    %310 = vmatprep.subr.mxu0 0.0
    %311 = vmatpush1.msra.mxu0 %v74
    %312 = vmatprep.subr.mxu0 0.0
    %313 = vmatpush1.msra.mxu0 %v75
    %314 = vmatprep.subr.mxu0 0.0
    %315 = vmatpush1.msra.mxu0 %v76
    %316 = vmatprep.subr.mxu0 0.0
    %317 = vmatpush1.msra.mxu0 0.0
    %318 = vmatprep.subr.mxu0 0.0
    %319 = vmatpush1.msra.mxu0 0.0
    %320 = vmatprep.subr.mxu0 0.0
    %321 = vmatpush1.msra.mxu0 0.0
    %322 = vmatprep.subr.mxu0 0.0
    %323 = vmatpush1.msra.mxu0 0.0
    %324 = vmatprep.subr.mxu0 0.0
    %325 = vmatpush1.msra.mxu0 0.0
    %326 = vmatprep.subr.mxu0 0.0
    %327 = vmatpush1.msra.mxu0 0.0
    %328 = vmatprep.subr.mxu0 0.0
    %329 = vmatpush1.msra.mxu0 0.0
    %330 = vmatprep.subr.mxu0 0.0
    %331 = vmatpush1.msra.mxu0 0.0
    %332 = vmatprep.subr.mxu0 0.0
    %333 = vmatpush1.msra.mxu0 0.0
    %334 = vmatprep.subr.mxu0 0.0
    %335 = vmatpush1.msra.mxu0 0.0
    %336 = vmatprep.subr.mxu0 0.0
    %337 = vmatpush1.msra.mxu0 0.0
    %338 = vmatprep.subr.mxu0 0.0
    %339 = vmatpush1.msra.mxu0 0.0
    %340 = vmatprep.subr.mxu0 0.0
    %341 = vmatpush1.msra.mxu0 0.0
    %342 = vmatprep.subr.mxu0 0.0
    %343 = vmatpush1.msra.mxu0 0.0
    %344 = vmatprep.subr.mxu0 0.0
    %345 = vmatpush1.msra.mxu0 0.0
    %346 = vmatprep.subr.mxu0 0.0
    %347 = vmatpush1.msra.mxu0 0.0
    %348 = vmatprep.subr.mxu0 0.0
    %349 = vmatpush1.msra.mxu0 0.0
    %350 = vmatprep.subr.mxu0 0.0
    %351 = vmatpush1.msra.mxu0 0.0
    %352 = vmatprep.subr.mxu0 0.0
    %353 = vmatpush1.msra.mxu0 0.0
    %354 = vmatprep.subr.mxu0 0.0
    %355 = vmatpush1.msra.mxu0 0.0
    %356 = vmatprep.subr.mxu0 0.0
    %357 = vmatpush1.msra.mxu0 0.0
    %358 = vmatprep.subr.mxu0 0.0
    %359 = vmatpush1.msra.mxu0 0.0
    %360 = vmatprep.subr.mxu0 0.0
    %361 = vmatpush1.msra.mxu0 0.0
    %362 = vmatprep.subr.mxu0 0.0
    %363 = vmatpush1.msra.mxu0 0.0
    %364 = vmatprep.subr.mxu0 0.0
    %365 = vmatpush1.msra.mxu0 0.0
    %366 = vmatprep.subr.mxu0 0.0
    %367 = vmatpush1.msra.mxu0 0.0
    %368 = vmatprep.subr.mxu0 0.0
    %369 = vmatpush1.msra.mxu0 0.0
    %370 = vmatprep.subr.mxu0 0.0
    %371 = vmatpush1.msra.mxu0 0.0
    %372 = vmatprep.mubr.f32.mxu0 0.0
    %373 = vmatmul.mubr.f32.gmra.mrb[0].mxu0 %v306
    %v374 = vpop.f32.mrb[0].mxu0
    %v375 = vadd.f32 0.0, %v374
    %v376 = vpop.f32.mrb[0].mxu0
    %377 = vdwg.mxu0
    %v378 = vadd.f32 %v305, %v375
    %v379 = vxor.u32 %v378, 2147483648
    %v380 = vmul.f32 %v379, 1.442695
    %v381 = vpow.pop %v380
    %v382 = vadd.f32 %v381, 1.0
    %v383 = vrcp.pop %v382
    %v384 = vmul.f32 1.0, %v383
    %v385 = vtanh.pop %v378
    %v386 = vmul.f32 %v384, %v191
    %388 = vrot.lane.b32.xlu0 %v385, 32
    %v389 = vpop.permute.xlu0 %388
    %v391 = vmul.f32 %v384, %v389
    %393 = vrot.lane.b32.xlu0 %v391, 32
    %v394 = vpop.permute.xlu0 %393
    %v396 = vadd.f32 %v386, %v394
    %v397 = vtanh.pop %v396
    %399 = vrot.lane.b32.xlu0 %v397, 32
    %v400 = vpop.permute.xlu0 %399
    %v402 = vmul.f32 %v384, %v400
    %404 = vrot.lane.b32.xlu0 %v402, 64
    %v405 = vpop.permute.xlu0 %404
    %408 = vrot.lane.b32.xlu0 %v300, 96
    %v409 = vpop.permute.xlu0 %408
    %v411 = vsel %vm99, %v405, %v409
    %v413 = vsel %vm203, %v411, 0
    %415 = vmatprep.subr.mxu0 0.0
    %416 = vmatpush1.msra.mxu0 %v77
    %417 = vmatprep.subr.mxu0 0.0
    %418 = vmatpush1.msra.mxu0 %v78
    %419 = vmatprep.subr.mxu0 0.0
    %420 = vmatpush1.msra.mxu0 %v79
    %421 = vmatprep.subr.mxu0 0.0
    %422 = vmatpush1.msra.mxu0 %v80
    %423 = vmatprep.subr.mxu0 0.0
    %424 = vmatpush1.msra.mxu0 %v81
    %425 = vmatprep.subr.mxu0 0.0
    %426 = vmatpush1.msra.mxu0 %v82
    %427 = vmatprep.subr.mxu0 0.0
    %428 = vmatpush1.msra.mxu0 %v83
    %429 = vmatprep.subr.mxu0 0.0
    %430 = vmatpush1.msra.mxu0 %v84
    %431 = vmatprep.subr.mxu0 0.0
    %432 = vmatpush1.msra.mxu0 0.0
    %433 = vmatprep.subr.mxu0 0.0
    %434 = vmatpush1.msra.mxu0 0.0
    %435 = vmatprep.subr.mxu0 0.0
    %436 = vmatpush1.msra.mxu0 0.0
    %437 = vmatprep.subr.mxu0 0.0
    %438 = vmatpush1.msra.mxu0 0.0
    %439 = vmatprep.subr.mxu0 0.0
    %440 = vmatpush1.msra.mxu0 0.0
    %441 = vmatprep.subr.mxu0 0.0
    %442 = vmatpush1.msra.mxu0 0.0
    %443 = vmatprep.subr.mxu0 0.0
    %444 = vmatpush1.msra.mxu0 0.0
    %445 = vmatprep.subr.mxu0 0.0
    %446 = vmatpush1.msra.mxu0 0.0
    %447 = vmatprep.subr.mxu0 0.0
    %448 = vmatpush1.msra.mxu0 0.0
    %449 = vmatprep.subr.mxu0 0.0
    %450 = vmatpush1.msra.mxu0 0.0
    %451 = vmatprep.subr.mxu0 0.0
    %452 = vmatpush1.msra.mxu0 0.0
    %453 = vmatprep.subr.mxu0 0.0
    %454 = vmatpush1.msra.mxu0 0.0
    %455 = vmatprep.subr.mxu0 0.0
    %456 = vmatpush1.msra.mxu0 0.0
    %457 = vmatprep.subr.mxu0 0.0
    %458 = vmatpush1.msra.mxu0 0.0
    %459 = vmatprep.subr.mxu0 0.0
    %460 = vmatpush1.msra.mxu0 0.0
    %461 = vmatprep.subr.mxu0 0.0
    %462 = vmatpush1.msra.mxu0 0.0
    %463 = vmatprep.subr.mxu0 0.0
    %464 = vmatpush1.msra.mxu0 0.0
    %465 = vmatprep.subr.mxu0 0.0
    %466 = vmatpush1.msra.mxu0 0.0
    %467 = vmatprep.subr.mxu0 0.0
    %468 = vmatpush1.msra.mxu0 0.0
    %469 = vmatprep.subr.mxu0 0.0
    %470 = vmatpush1.msra.mxu0 0.0
    %471 = vmatprep.subr.mxu0 0.0
    %472 = vmatpush1.msra.mxu0 0.0
    %473 = vmatprep.subr.mxu0 0.0
    %474 = vmatpush1.msra.mxu0 0.0
    %475 = vmatprep.subr.mxu0 0.0
    %476 = vmatpush1.msra.mxu0 0.0
    %477 = vmatprep.subr.mxu0 0.0
    %478 = vmatpush1.msra.mxu0 0.0
    %479 = vmatprep.mubr.f32.mxu0 0.0
    %480 = vmatmul.mubr.f32.gmra.mrb[0].mxu0 %v413
    %v481 = vpop.f32.mrb[0].mxu0
    %v482 = vadd.f32 %v90, %v481
    %v483 = vpop.f32.mrb[0].mxu0
    %484 = vdwg.mxu0
    %v485 = vxor.u32 %v482, 2147483648
    %v486 = vmul.f32 %v485, 1.442695
    %v487 = vpow.pop %v486
    %v488 = vadd.f32 %v487, 1.0
    %v489 = vrcp.pop %v488
    %v490 = vmul.f32 1.0, %v489
    %v491 = vtanh.pop %v482
    %v492 = vmul.f32 %v490, %v294
    %494 = vrot.lane.b32.xlu0 %v491, 32
    %v495 = vpop.permute.xlu0 %494
    %v497 = vmul.f32 %v490, %v495
    %499 = vrot.lane.b32.xlu0 %v497, 32
    %v500 = vpop.permute.xlu0 %499
    %v502 = vadd.f32 %v492, %v500
    %v503 = vtanh.pop %v502
    %505 = vrot.lane.b32.xlu0 %v503, 32
    %v506 = vpop.permute.xlu0 %505
    %v508 = vmul.f32 %v490, %v506
    %509 = vset.pattern.permute.xlu0 2
    %510 = vperm.xlu0 %509, %v93
    %v511 = vpop.permute.xlu0 %510
    %vm512 = vcmp.eq.s32.totalorder %v511, 1
    %v513 = vsel %vm512, %v72, %v67
    %v514 = vsel %vm99, %v405, 0
    %516 = vmatprep.subr.mxu0 0.0
    %517 = vmatpush1.msra.mxu0 %v73
    %518 = vmatprep.subr.mxu0 0.0
    %519 = vmatpush1.msra.mxu0 %v74
    %520 = vmatprep.subr.mxu0 0.0
    %521 = vmatpush1.msra.mxu0 %v75
    %522 = vmatprep.subr.mxu0 0.0
    %523 = vmatpush1.msra.mxu0 %v76
    %524 = vmatprep.subr.mxu0 0.0
    %525 = vmatpush1.msra.mxu0 0.0
    %526 = vmatprep.subr.mxu0 0.0
    %527 = vmatpush1.msra.mxu0 0.0
    %528 = vmatprep.subr.mxu0 0.0
    %529 = vmatpush1.msra.mxu0 0.0
    %530 = vmatprep.subr.mxu0 0.0
    %531 = vmatpush1.msra.mxu0 0.0
    %532 = vmatprep.subr.mxu0 0.0
    %533 = vmatpush1.msra.mxu0 0.0
    %534 = vmatprep.subr.mxu0 0.0
    %535 = vmatpush1.msra.mxu0 0.0
    %536 = vmatprep.subr.mxu0 0.0
    %537 = vmatpush1.msra.mxu0 0.0
    %538 = vmatprep.subr.mxu0 0.0
    %539 = vmatpush1.msra.mxu0 0.0
    %540 = vmatprep.subr.mxu0 0.0
    %541 = vmatpush1.msra.mxu0 0.0
    %542 = vmatprep.subr.mxu0 0.0
    %543 = vmatpush1.msra.mxu0 0.0
    %544 = vmatprep.subr.mxu0 0.0
    %545 = vmatpush1.msra.mxu0 0.0
    %546 = vmatprep.subr.mxu0 0.0
    %547 = vmatpush1.msra.mxu0 0.0
    %548 = vmatprep.subr.mxu0 0.0
    %549 = vmatpush1.msra.mxu0 0.0
    %550 = vmatprep.subr.mxu0 0.0
    %551 = vmatpush1.msra.mxu0 0.0
    %552 = vmatprep.subr.mxu0 0.0
    %553 = vmatpush1.msra.mxu0 0.0
    %554 = vmatprep.subr.mxu0 0.0
    %555 = vmatpush1.msra.mxu0 0.0
    %556 = vmatprep.subr.mxu0 0.0
    %557 = vmatpush1.msra.mxu0 0.0
    %558 = vmatprep.subr.mxu0 0.0
    %559 = vmatpush1.msra.mxu0 0.0
    %560 = vmatprep.subr.mxu0 0.0
    %561 = vmatpush1.msra.mxu0 0.0
    %562 = vmatprep.subr.mxu0 0.0
    %563 = vmatpush1.msra.mxu0 0.0
    %564 = vmatprep.subr.mxu0 0.0
    %565 = vmatpush1.msra.mxu0 0.0
    %566 = vmatprep.subr.mxu0 0.0
    %567 = vmatpush1.msra.mxu0 0.0
    %568 = vmatprep.subr.mxu0 0.0
    %569 = vmatpush1.msra.mxu0 0.0
    %570 = vmatprep.subr.mxu0 0.0
    %571 = vmatpush1.msra.mxu0 0.0
    %572 = vmatprep.subr.mxu0 0.0
    %573 = vmatpush1.msra.mxu0 0.0
    %574 = vmatprep.subr.mxu0 0.0
    %575 = vmatpush1.msra.mxu0 0.0
    %576 = vmatprep.subr.mxu0 0.0
    %577 = vmatpush1.msra.mxu0 0.0
    %578 = vmatprep.subr.mxu0 0.0
    %579 = vmatpush1.msra.mxu0 0.0
    %580 = vmatprep.mubr.f32.mxu0 0.0
    %581 = vmatmul.mubr.f32.gmra.mrb[0].mxu0 %v514
    %v582 = vpop.f32.mrb[0].mxu0
    %v583 = vadd.f32 0.0, %v582
    %v584 = vpop.f32.mrb[0].mxu0
    %585 = vdwg.mxu0
    %v586 = vadd.f32 %v513, %v583
    %v587 = vxor.u32 %v586, 2147483648
    %v588 = vmul.f32 %v587, 1.442695
    %v589 = vpow.pop %v588
    %v590 = vadd.f32 %v589, 1.0
    %v591 = vrcp.pop %v590
    %v592 = vmul.f32 1.0, %v591
    %v593 = vtanh.pop %v586
    %v594 = vmul.f32 %v592, %v396
    %596 = vrot.lane.b32.xlu0 %v593, 32
    %v597 = vpop.permute.xlu0 %596
    %v599 = vmul.f32 %v592, %v597
    %601 = vrot.lane.b32.xlu0 %v599, 32
    %v602 = vpop.permute.xlu0 %601
    %v604 = vadd.f32 %v594, %v602
    %v605 = vtanh.pop %v604
    %607 = vrot.lane.b32.xlu0 %v605, 32
    %v608 = vpop.permute.xlu0 %607
    %v610 = vmul.f32 %v592, %v608
    %612 = vrot.lane.b32.xlu0 %v610, 64
    %v613 = vpop.permute.xlu0 %612
    %616 = vrot.lane.b32.xlu0 %v508, 96
    %v617 = vpop.permute.xlu0 %616
    %v619 = vsel %vm99, %v613, %v617
    %v621 = vsel %vm203, %v619, 0
    %623 = vmatprep.subr.mxu0 0.0
    %624 = vmatpush1.msra.mxu0 %v77
    %625 = vmatprep.subr.mxu0 0.0
    %626 = vmatpush1.msra.mxu0 %v78
    %627 = vmatprep.subr.mxu0 0.0
    %628 = vmatpush1.msra.mxu0 %v79
    %629 = vmatprep.subr.mxu0 0.0
    %630 = vmatpush1.msra.mxu0 %v80
    %631 = vmatprep.subr.mxu0 0.0
    %632 = vmatpush1.msra.mxu0 %v81
    %633 = vmatprep.subr.mxu0 0.0
    %634 = vmatpush1.msra.mxu0 %v82
    %635 = vmatprep.subr.mxu0 0.0
    %636 = vmatpush1.msra.mxu0 %v83
    %637 = vmatprep.subr.mxu0 0.0
    %638 = vmatpush1.msra.mxu0 %v84
    %639 = vmatprep.subr.mxu0 0.0
    %640 = vmatpush1.msra.mxu0 0.0
    %641 = vmatprep.subr.mxu0 0.0
    %642 = vmatpush1.msra.mxu0 0.0
    %643 = vmatprep.subr.mxu0 0.0
    %644 = vmatpush1.msra.mxu0 0.0
    %645 = vmatprep.subr.mxu0 0.0
    %646 = vmatpush1.msra.mxu0 0.0
    %647 = vmatprep.subr.mxu0 0.0
    %648 = vmatpush1.msra.mxu0 0.0
    %649 = vmatprep.subr.mxu0 0.0
    %650 = vmatpush1.msra.mxu0 0.0
    %651 = vmatprep.subr.mxu0 0.0
    %652 = vmatpush1.msra.mxu0 0.0
    %653 = vmatprep.subr.mxu0 0.0
    %654 = vmatpush1.msra.mxu0 0.0
    %655 = vmatprep.subr.mxu0 0.0
    %656 = vmatpush1.msra.mxu0 0.0
    %657 = vmatprep.subr.mxu0 0.0
    %658 = vmatpush1.msra.mxu0 0.0
    %659 = vmatprep.subr.mxu0 0.0
    %660 = vmatpush1.msra.mxu0 0.0
    %661 = vmatprep.subr.mxu0 0.0
    %662 = vmatpush1.msra.mxu0 0.0
    %663 = vmatprep.subr.mxu0 0.0
    %664 = vmatpush1.msra.mxu0 0.0
    %665 = vmatprep.subr.mxu0 0.0
    %666 = vmatpush1.msra.mxu0 0.0
    %667 = vmatprep.subr.mxu0 0.0
    %668 = vmatpush1.msra.mxu0 0.0
    %669 = vmatprep.subr.mxu0 0.0
    %670 = vmatpush1.msra.mxu0 0.0
    %671 = vmatprep.subr.mxu0 0.0
    %672 = vmatpush1.msra.mxu0 0.0
    %673 = vmatprep.subr.mxu0 0.0
    %674 = vmatpush1.msra.mxu0 0.0
    %675 = vmatprep.subr.mxu0 0.0
    %676 = vmatpush1.msra.mxu0 0.0
    %677 = vmatprep.subr.mxu0 0.0
    %678 = vmatpush1.msra.mxu0 0.0
    %679 = vmatprep.subr.mxu0 0.0
    %680 = vmatpush1.msra.mxu0 0.0
    %681 = vmatprep.subr.mxu0 0.0
    %682 = vmatpush1.msra.mxu0 0.0
    %683 = vmatprep.subr.mxu0 0.0
    %684 = vmatpush1.msra.mxu0 0.0
    %685 = vmatprep.subr.mxu0 0.0
    %686 = vmatpush1.msra.mxu0 0.0
    %687 = vmatprep.mubr.f32.mxu0 0.0
    %688 = vmatmul.mubr.f32.gmra.mrb[0].mxu0 %v621
    %v689 = vpop.f32.mrb[0].mxu0
    %v690 = vadd.f32 %v90, %v689
    %v691 = vpop.f32.mrb[0].mxu0
    %692 = vdwg.mxu0
    %v693 = vxor.u32 %v690, 2147483648
    %v694 = vmul.f32 %v693, 1.442695
    %v695 = vpow.pop %v694
    %v696 = vadd.f32 %v695, 1.0
    %v697 = vrcp.pop %v696
    %v698 = vmul.f32 1.0, %v697
    %v699 = vtanh.pop %v690
    %v700 = vmul.f32 %v698, %v502
    %702 = vrot.lane.b32.xlu0 %v699, 32
    %v703 = vpop.permute.xlu0 %702
    %v705 = vmul.f32 %v698, %v703
    %707 = vrot.lane.b32.xlu0 %v705, 32
    %v708 = vpop.permute.xlu0 %707
    %v710 = vadd.f32 %v700, %v708
    %v711 = vtanh.pop %v710
    %713 = vrot.lane.b32.xlu0 %v711, 32
    %v714 = vpop.permute.xlu0 %713
    %v716 = vmul.f32 %v698, %v714
    %717 = vset.pattern.permute.xlu0 3
    %718 = vperm.xlu0 %717, %v93
    %v719 = vpop.permute.xlu0 %718
    %vm720 = vcmp.eq.s32.totalorder %v719, 1
    %v721 = vsel %vm720, %v72, %v67
    %v722 = vsel %vm99, %v613, 0
    %724 = vmatprep.subr.mxu0 0.0
    %725 = vmatpush1.msra.mxu0 %v73
    %726 = vmatprep.subr.mxu0 0.0
    %727 = vmatpush1.msra.mxu0 %v74
    %728 = vmatprep.subr.mxu0 0.0
    %729 = vmatpush1.msra.mxu0 %v75
    %730 = vmatprep.subr.mxu0 0.0
    %731 = vmatpush1.msra.mxu0 %v76
    %732 = vmatprep.subr.mxu0 0.0
    %733 = vmatpush1.msra.mxu0 0.0
    %734 = vmatprep.subr.mxu0 0.0
    %735 = vmatpush1.msra.mxu0 0.0
    %736 = vmatprep.subr.mxu0 0.0
    %737 = vmatpush1.msra.mxu0 0.0
    %738 = vmatprep.subr.mxu0 0.0
    %739 = vmatpush1.msra.mxu0 0.0
    %740 = vmatprep.subr.mxu0 0.0
    %741 = vmatpush1.msra.mxu0 0.0
    %742 = vmatprep.subr.mxu0 0.0
    %743 = vmatpush1.msra.mxu0 0.0
    %744 = vmatprep.subr.mxu0 0.0
    %745 = vmatpush1.msra.mxu0 0.0
    %746 = vmatprep.subr.mxu0 0.0
    %747 = vmatpush1.msra.mxu0 0.0
    %748 = vmatprep.subr.mxu0 0.0
    %749 = vmatpush1.msra.mxu0 0.0
    %750 = vmatprep.subr.mxu0 0.0
    %751 = vmatpush1.msra.mxu0 0.0
    %752 = vmatprep.subr.mxu0 0.0
    %753 = vmatpush1.msra.mxu0 0.0
    %754 = vmatprep.subr.mxu0 0.0
    %755 = vmatpush1.msra.mxu0 0.0
    %756 = vmatprep.subr.mxu0 0.0
    %757 = vmatpush1.msra.mxu0 0.0
    %758 = vmatprep.subr.mxu0 0.0
    %759 = vmatpush1.msra.mxu0 0.0
    %760 = vmatprep.subr.mxu0 0.0
    %761 = vmatpush1.msra.mxu0 0.0
    %762 = vmatprep.subr.mxu0 0.0
    %763 = vmatpush1.msra.mxu0 0.0
    %764 = vmatprep.subr.mxu0 0.0
    %765 = vmatpush1.msra.mxu0 0.0
    %766 = vmatprep.subr.mxu0 0.0
    %767 = vmatpush1.msra.mxu0 0.0
    %768 = vmatprep.subr.mxu0 0.0
    %769 = vmatpush1.msra.mxu0 0.0
    %770 = vmatprep.subr.mxu0 0.0
    %771 = vmatpush1.msra.mxu0 0.0
    %772 = vmatprep.subr.mxu0 0.0
    %773 = vmatpush1.msra.mxu0 0.0
    %774 = vmatprep.subr.mxu0 0.0
    %775 = vmatpush1.msra.mxu0 0.0
    %776 = vmatprep.subr.mxu0 0.0
    %777 = vmatpush1.msra.mxu0 0.0
    %778 = vmatprep.subr.mxu0 0.0
    %779 = vmatpush1.msra.mxu0 0.0
    %780 = vmatprep.subr.mxu0 0.0
    %781 = vmatpush1.msra.mxu0 0.0
    %782 = vmatprep.subr.mxu0 0.0
    %783 = vmatpush1.msra.mxu0 0.0
    %784 = vmatprep.subr.mxu0 0.0
    %785 = vmatpush1.msra.mxu0 0.0
    %786 = vmatprep.subr.mxu0 0.0
    %787 = vmatpush1.msra.mxu0 0.0
    %788 = vmatprep.mubr.f32.mxu0 0.0
    %789 = vmatmul.mubr.f32.gmra.mrb[0].mxu0 %v722
    %v790 = vpop.f32.mrb[0].mxu0
    %v791 = vadd.f32 0.0, %v790
    %v792 = vpop.f32.mrb[0].mxu0
    %793 = vdwg.mxu0
    %v794 = vadd.f32 %v721, %v791
    %v795 = vxor.u32 %v794, 2147483648
    %v796 = vmul.f32 %v795, 1.442695
    %v797 = vpow.pop %v796
    %v798 = vadd.f32 %v797, 1.0
    %v799 = vrcp.pop %v798
    %v800 = vmul.f32 1.0, %v799
    %v801 = vtanh.pop %v794
    %v802 = vmul.f32 %v800, %v604
    %804 = vrot.lane.b32.xlu0 %v801, 32
    %v805 = vpop.permute.xlu0 %804
    %v807 = vmul.f32 %v800, %v805
    %809 = vrot.lane.b32.xlu0 %v807, 32
    %v810 = vpop.permute.xlu0 %809
    %v812 = vadd.f32 %v802, %v810
    %v813 = vtanh.pop %v812
    %815 = vrot.lane.b32.xlu0 %v813, 32
    %v816 = vpop.permute.xlu0 %815
    %v818 = vmul.f32 %v800, %v816
    %820 = vrot.lane.b32.xlu0 %v818, 64
    %v821 = vpop.permute.xlu0 %820
    %824 = vrot.lane.b32.xlu0 %v716, 96
    %v825 = vpop.permute.xlu0 %824
    %v827 = vsel %vm99, %v821, %v825
    %v829 = vsel %vm203, %v827, 0
    %831 = vmatprep.subr.mxu0 0.0
    %832 = vmatpush1.msra.mxu0 %v77
    %833 = vmatprep.subr.mxu0 0.0
    %834 = vmatpush1.msra.mxu0 %v78
    %835 = vmatprep.subr.mxu0 0.0
    %836 = vmatpush1.msra.mxu0 %v79
    %837 = vmatprep.subr.mxu0 0.0
    %838 = vmatpush1.msra.mxu0 %v80
    %839 = vmatprep.subr.mxu0 0.0
    %840 = vmatpush1.msra.mxu0 %v81
    %841 = vmatprep.subr.mxu0 0.0
    %842 = vmatpush1.msra.mxu0 %v82
    %843 = vmatprep.subr.mxu0 0.0
    %844 = vmatpush1.msra.mxu0 %v83
    %845 = vmatprep.subr.mxu0 0.0
    %846 = vmatpush1.msra.mxu0 %v84
    %847 = vmatprep.subr.mxu0 0.0
    %848 = vmatpush1.msra.mxu0 0.0
    %849 = vmatprep.subr.mxu0 0.0
    %850 = vmatpush1.msra.mxu0 0.0
    %851 = vmatprep.subr.mxu0 0.0
    %852 = vmatpush1.msra.mxu0 0.0
    %853 = vmatprep.subr.mxu0 0.0
    %854 = vmatpush1.msra.mxu0 0.0
    %855 = vmatprep.subr.mxu0 0.0
    %856 = vmatpush1.msra.mxu0 0.0
    %857 = vmatprep.subr.mxu0 0.0
    %858 = vmatpush1.msra.mxu0 0.0
    %859 = vmatprep.subr.mxu0 0.0
    %860 = vmatpush1.msra.mxu0 0.0
    %861 = vmatprep.subr.mxu0 0.0
    %862 = vmatpush1.msra.mxu0 0.0
    %863 = vmatprep.subr.mxu0 0.0
    %864 = vmatpush1.msra.mxu0 0.0
    %865 = vmatprep.subr.mxu0 0.0
    %866 = vmatpush1.msra.mxu0 0.0
    %867 = vmatprep.subr.mxu0 0.0
    %868 = vmatpush1.msra.mxu0 0.0
    %869 = vmatprep.subr.mxu0 0.0
    %870 = vmatpush1.msra.mxu0 0.0
    %871 = vmatprep.subr.mxu0 0.0
    %872 = vmatpush1.msra.mxu0 0.0
    %873 = vmatprep.subr.mxu0 0.0
    %874 = vmatpush1.msra.mxu0 0.0
    %875 = vmatprep.subr.mxu0 0.0
    %876 = vmatpush1.msra.mxu0 0.0
    %877 = vmatprep.subr.mxu0 0.0
    %878 = vmatpush1.msra.mxu0 0.0
    %879 = vmatprep.subr.mxu0 0.0
    %880 = vmatpush1.msra.mxu0 0.0
    %881 = vmatprep.subr.mxu0 0.0
    %882 = vmatpush1.msra.mxu0 0.0
    %883 = vmatprep.subr.mxu0 0.0
    %884 = vmatpush1.msra.mxu0 0.0
    %885 = vmatprep.subr.mxu0 0.0
    %886 = vmatpush1.msra.mxu0 0.0
    %887 = vmatprep.subr.mxu0 0.0
    %888 = vmatpush1.msra.mxu0 0.0
    %889 = vmatprep.subr.mxu0 0.0
    %890 = vmatpush1.msra.mxu0 0.0
    %891 = vmatprep.subr.mxu0 0.0
    %892 = vmatpush1.msra.mxu0 0.0
    %893 = vmatprep.subr.mxu0 0.0
    %894 = vmatpush1.msra.mxu0 0.0
    %895 = vmatprep.mubr.f32.mxu0 0.0
    %896 = vmatmul.mubr.f32.gmra.mrb[0].mxu0 %v829
    %v897 = vpop.f32.mrb[0].mxu0
    %v898 = vadd.f32 %v90, %v897
    %v899 = vpop.f32.mrb[0].mxu0
    %900 = vdwg.mxu0
    %v901 = vxor.u32 %v898, 2147483648
    %v902 = vmul.f32 %v901, 1.442695
    %v903 = vpow.pop %v902
    %v904 = vadd.f32 %v903, 1.0
    %v905 = vrcp.pop %v904
    %v906 = vmul.f32 1.0, %v905
    %v907 = vtanh.pop %v898
    %v908 = vmul.f32 %v906, %v710
    %910 = vrot.lane.b32.xlu0 %v907, 32
    %v911 = vpop.permute.xlu0 %910
    %v913 = vmul.f32 %v906, %v911
    %915 = vrot.lane.b32.xlu0 %v913, 32
    %v916 = vpop.permute.xlu0 %915
    %v918 = vadd.f32 %v908, %v916
    %v919 = vtanh.pop %v918
    %921 = vrot.lane.b32.xlu0 %v919, 32
    %v922 = vpop.permute.xlu0 %921
    %v924 = vmul.f32 %v906, %v922
    %925 = vset.pattern.permute.xlu0 4
    %926 = vperm.xlu0 %925, %v93
    %v927 = vpop.permute.xlu0 %926
    %vm928 = vcmp.eq.s32.totalorder %v927, 1
    %v929 = vsel %vm928, %v72, %v67
    %v930 = vsel %vm99, %v821, 0
    %932 = vmatprep.subr.mxu0 0.0
    %933 = vmatpush1.msra.mxu0 %v73
    %934 = vmatprep.subr.mxu0 0.0
    %935 = vmatpush1.msra.mxu0 %v74
    %936 = vmatprep.subr.mxu0 0.0
    %937 = vmatpush1.msra.mxu0 %v75
    %938 = vmatprep.subr.mxu0 0.0
    %939 = vmatpush1.msra.mxu0 %v76
    %940 = vmatprep.subr.mxu0 0.0
    %941 = vmatpush1.msra.mxu0 0.0
    %942 = vmatprep.subr.mxu0 0.0
    %943 = vmatpush1.msra.mxu0 0.0
    %944 = vmatprep.subr.mxu0 0.0
    %945 = vmatpush1.msra.mxu0 0.0
    %946 = vmatprep.subr.mxu0 0.0
    %947 = vmatpush1.msra.mxu0 0.0
    %948 = vmatprep.subr.mxu0 0.0
    %949 = vmatpush1.msra.mxu0 0.0
    %950 = vmatprep.subr.mxu0 0.0
    %951 = vmatpush1.msra.mxu0 0.0
    %952 = vmatprep.subr.mxu0 0.0
    %953 = vmatpush1.msra.mxu0 0.0
    %954 = vmatprep.subr.mxu0 0.0
    %955 = vmatpush1.msra.mxu0 0.0
    %956 = vmatprep.subr.mxu0 0.0
    %957 = vmatpush1.msra.mxu0 0.0
    %958 = vmatprep.subr.mxu0 0.0
    %959 = vmatpush1.msra.mxu0 0.0
    %960 = vmatprep.subr.mxu0 0.0
    %961 = vmatpush1.msra.mxu0 0.0
    %962 = vmatprep.subr.mxu0 0.0
    %963 = vmatpush1.msra.mxu0 0.0
    %964 = vmatprep.subr.mxu0 0.0
    %965 = vmatpush1.msra.mxu0 0.0
    %966 = vmatprep.subr.mxu0 0.0
    %967 = vmatpush1.msra.mxu0 0.0
    %968 = vmatprep.subr.mxu0 0.0
    %969 = vmatpush1.msra.mxu0 0.0
    %970 = vmatprep.subr.mxu0 0.0
    %971 = vmatpush1.msra.mxu0 0.0
    %972 = vmatprep.subr.mxu0 0.0
    %973 = vmatpush1.msra.mxu0 0.0
    %974 = vmatprep.subr.mxu0 0.0
    %975 = vmatpush1.msra.mxu0 0.0
    %976 = vmatprep.subr.mxu0 0.0
    %977 = vmatpush1.msra.mxu0 0.0
    %978 = vmatprep.subr.mxu0 0.0
    %979 = vmatpush1.msra.mxu0 0.0
    %980 = vmatprep.subr.mxu0 0.0
    %981 = vmatpush1.msra.mxu0 0.0
    %982 = vmatprep.subr.mxu0 0.0
    %983 = vmatpush1.msra.mxu0 0.0
    %984 = vmatprep.subr.mxu0 0.0
    %985 = vmatpush1.msra.mxu0 0.0
    %986 = vmatprep.subr.mxu0 0.0
    %987 = vmatpush1.msra.mxu0 0.0
    %988 = vmatprep.subr.mxu0 0.0
    %989 = vmatpush1.msra.mxu0 0.0
    %990 = vmatprep.subr.mxu0 0.0
    %991 = vmatpush1.msra.mxu0 0.0
    %992 = vmatprep.subr.mxu0 0.0
    %993 = vmatpush1.msra.mxu0 0.0
    %994 = vmatprep.subr.mxu0 0.0
    %995 = vmatpush1.msra.mxu0 0.0
    %996 = vmatprep.mubr.f32.mxu0 0.0
    %997 = vmatmul.mubr.f32.gmra.mrb[0].mxu0 %v930
    %v998 = vpop.f32.mrb[0].mxu0
    %v999 = vadd.f32 0.0, %v998
    %v1000 = vpop.f32.mrb[0].mxu0
    %1001 = vdwg.mxu0
    %v1002 = vadd.f32 %v929, %v999
    %v1003 = vxor.u32 %v1002, 2147483648
    %v1004 = vmul.f32 %v1003, 1.442695
    %v1005 = vpow.pop %v1004
    %v1006 = vadd.f32 %v1005, 1.0
    %v1007 = vrcp.pop %v1006
    %v1008 = vmul.f32 1.0, %v1007
    %v1009 = vtanh.pop %v1002
    %v1010 = vmul.f32 %v1008, %v812
    %1012 = vrot.lane.b32.xlu0 %v1009, 32
    %v1013 = vpop.permute.xlu0 %1012
    %v1015 = vmul.f32 %v1008, %v1013
    %1017 = vrot.lane.b32.xlu0 %v1015, 32
    %v1018 = vpop.permute.xlu0 %1017
    %v1020 = vadd.f32 %v1010, %v1018
    %v1021 = vtanh.pop %v1020
    %1023 = vrot.lane.b32.xlu0 %v1021, 32
    %v1024 = vpop.permute.xlu0 %1023
    %v1026 = vmul.f32 %v1008, %v1024
    %1028 = vrot.lane.b32.xlu0 %v1026, 64
    %v1029 = vpop.permute.xlu0 %1028
    %1032 = vrot.lane.b32.xlu0 %v924, 96
    %v1033 = vpop.permute.xlu0 %1032
    %v1035 = vsel %vm99, %v1029, %v1033
    %v1037 = vsel %vm203, %v1035, 0
    %1039 = vmatprep.subr.mxu0 0.0
    %1040 = vmatpush1.msra.mxu0 %v77
    %1041 = vmatprep.subr.mxu0 0.0
    %1042 = vmatpush1.msra.mxu0 %v78
    %1043 = vmatprep.subr.mxu0 0.0
    %1044 = vmatpush1.msra.mxu0 %v79
    %1045 = vmatprep.subr.mxu0 0.0
    %1046 = vmatpush1.msra.mxu0 %v80
    %1047 = vmatprep.subr.mxu0 0.0
    %1048 = vmatpush1.msra.mxu0 %v81
    %1049 = vmatprep.subr.mxu0 0.0
    %1050 = vmatpush1.msra.mxu0 %v82
    %1051 = vmatprep.subr.mxu0 0.0
    %1052 = vmatpush1.msra.mxu0 %v83
    %1053 = vmatprep.subr.mxu0 0.0
    %1054 = vmatpush1.msra.mxu0 %v84
    %1055 = vmatprep.subr.mxu0 0.0
    %1056 = vmatpush1.msra.mxu0 0.0
    %1057 = vmatprep.subr.mxu0 0.0
    %1058 = vmatpush1.msra.mxu0 0.0
    %1059 = vmatprep.subr.mxu0 0.0
    %1060 = vmatpush1.msra.mxu0 0.0
    %1061 = vmatprep.subr.mxu0 0.0
    %1062 = vmatpush1.msra.mxu0 0.0
    %1063 = vmatprep.subr.mxu0 0.0
    %1064 = vmatpush1.msra.mxu0 0.0
    %1065 = vmatprep.subr.mxu0 0.0
    %1066 = vmatpush1.msra.mxu0 0.0
    %1067 = vmatprep.subr.mxu0 0.0
    %1068 = vmatpush1.msra.mxu0 0.0
    %1069 = vmatprep.subr.mxu0 0.0
    %1070 = vmatpush1.msra.mxu0 0.0
    %1071 = vmatprep.subr.mxu0 0.0
    %1072 = vmatpush1.msra.mxu0 0.0
    %1073 = vmatprep.subr.mxu0 0.0
    %1074 = vmatpush1.msra.mxu0 0.0
    %1075 = vmatprep.subr.mxu0 0.0
    %1076 = vmatpush1.msra.mxu0 0.0
    %1077 = vmatprep.subr.mxu0 0.0
    %1078 = vmatpush1.msra.mxu0 0.0
    %1079 = vmatprep.subr.mxu0 0.0
    %1080 = vmatpush1.msra.mxu0 0.0
    %1081 = vmatprep.subr.mxu0 0.0
    %1082 = vmatpush1.msra.mxu0 0.0
    %1083 = vmatprep.subr.mxu0 0.0
    %1084 = vmatpush1.msra.mxu0 0.0
    %1085 = vmatprep.subr.mxu0 0.0
    %1086 = vmatpush1.msra.mxu0 0.0
    %1087 = vmatprep.subr.mxu0 0.0
    %1088 = vmatpush1.msra.mxu0 0.0
    %1089 = vmatprep.subr.mxu0 0.0
    %1090 = vmatpush1.msra.mxu0 0.0
    %1091 = vmatprep.subr.mxu0 0.0
    %1092 = vmatpush1.msra.mxu0 0.0
    %1093 = vmatprep.subr.mxu0 0.0
    %1094 = vmatpush1.msra.mxu0 0.0
    %1095 = vmatprep.subr.mxu0 0.0
    %1096 = vmatpush1.msra.mxu0 0.0
    %1097 = vmatprep.subr.mxu0 0.0
    %1098 = vmatpush1.msra.mxu0 0.0
    %1099 = vmatprep.subr.mxu0 0.0
    %1100 = vmatpush1.msra.mxu0 0.0
    %1101 = vmatprep.subr.mxu0 0.0
    %1102 = vmatpush1.msra.mxu0 0.0
    %1103 = vmatprep.mubr.f32.mxu0 0.0
    %1104 = vmatmul.mubr.f32.gmra.mrb[0].mxu0 %v1037
    %v1105 = vpop.f32.mrb[0].mxu0
    %v1106 = vadd.f32 %v90, %v1105
    %v1107 = vpop.f32.mrb[0].mxu0
    %1108 = vdwg.mxu0
    %v1109 = vxor.u32 %v1106, 2147483648
    %v1110 = vmul.f32 %v1109, 1.442695
    %v1111 = vpow.pop %v1110
    %v1112 = vadd.f32 %v1111, 1.0
    %v1113 = vrcp.pop %v1112
    %v1114 = vmul.f32 1.0, %v1113
    %v1115 = vtanh.pop %v1106
    %v1116 = vmul.f32 %v1114, %v918
    %1118 = vrot.lane.b32.xlu0 %v1115, 32
    %v1119 = vpop.permute.xlu0 %1118
    %v1121 = vmul.f32 %v1114, %v1119
    %1123 = vrot.lane.b32.xlu0 %v1121, 32
    %v1124 = vpop.permute.xlu0 %1123
    %v1126 = vadd.f32 %v1116, %v1124
    %v1127 = vtanh.pop %v1126
    %1129 = vrot.lane.b32.xlu0 %v1127, 32
    %v1130 = vpop.permute.xlu0 %1129
    %v1132 = vmul.f32 %v1114, %v1130
    %1133 = vset.pattern.permute.xlu0 5
    %1134 = vperm.xlu0 %1133, %v93
    %v1135 = vpop.permute.xlu0 %1134
    %vm1136 = vcmp.eq.s32.totalorder %v1135, 1
    %v1137 = vsel %vm1136, %v72, %v67
    %v1138 = vsel %vm99, %v1029, 0
    %1140 = vmatprep.subr.mxu0 0.0
    %1141 = vmatpush1.msra.mxu0 %v73
    %1142 = vmatprep.subr.mxu0 0.0
    %1143 = vmatpush1.msra.mxu0 %v74
    %1144 = vmatprep.subr.mxu0 0.0
    %1145 = vmatpush1.msra.mxu0 %v75
    %1146 = vmatprep.subr.mxu0 0.0
    %1147 = vmatpush1.msra.mxu0 %v76
    %1148 = vmatprep.subr.mxu0 0.0
    %1149 = vmatpush1.msra.mxu0 0.0
    %1150 = vmatprep.subr.mxu0 0.0
    %1151 = vmatpush1.msra.mxu0 0.0
    %1152 = vmatprep.subr.mxu0 0.0
    %1153 = vmatpush1.msra.mxu0 0.0
    %1154 = vmatprep.subr.mxu0 0.0
    %1155 = vmatpush1.msra.mxu0 0.0
    %1156 = vmatprep.subr.mxu0 0.0
    %1157 = vmatpush1.msra.mxu0 0.0
    %1158 = vmatprep.subr.mxu0 0.0
    %1159 = vmatpush1.msra.mxu0 0.0
    %1160 = vmatprep.subr.mxu0 0.0
    %1161 = vmatpush1.msra.mxu0 0.0
    %1162 = vmatprep.subr.mxu0 0.0
    %1163 = vmatpush1.msra.mxu0 0.0
    %1164 = vmatprep.subr.mxu0 0.0
    %1165 = vmatpush1.msra.mxu0 0.0
    %1166 = vmatprep.subr.mxu0 0.0
    %1167 = vmatpush1.msra.mxu0 0.0
    %1168 = vmatprep.subr.mxu0 0.0
    %1169 = vmatpush1.msra.mxu0 0.0
    %1170 = vmatprep.subr.mxu0 0.0
    %1171 = vmatpush1.msra.mxu0 0.0
    %1172 = vmatprep.subr.mxu0 0.0
    %1173 = vmatpush1.msra.mxu0 0.0
    %1174 = vmatprep.subr.mxu0 0.0
    %1175 = vmatpush1.msra.mxu0 0.0
    %1176 = vmatprep.subr.mxu0 0.0
    %1177 = vmatpush1.msra.mxu0 0.0
    %1178 = vmatprep.subr.mxu0 0.0
    %1179 = vmatpush1.msra.mxu0 0.0
    %1180 = vmatprep.subr.mxu0 0.0
    %1181 = vmatpush1.msra.mxu0 0.0
    %1182 = vmatprep.subr.mxu0 0.0
    %1183 = vmatpush1.msra.mxu0 0.0
    %1184 = vmatprep.subr.mxu0 0.0
    %1185 = vmatpush1.msra.mxu0 0.0
    %1186 = vmatprep.subr.mxu0 0.0
    %1187 = vmatpush1.msra.mxu0 0.0
    %1188 = vmatprep.subr.mxu0 0.0
    %1189 = vmatpush1.msra.mxu0 0.0
    %1190 = vmatprep.subr.mxu0 0.0
    %1191 = vmatpush1.msra.mxu0 0.0
    %1192 = vmatprep.subr.mxu0 0.0
    %1193 = vmatpush1.msra.mxu0 0.0
    %1194 = vmatprep.subr.mxu0 0.0
    %1195 = vmatpush1.msra.mxu0 0.0
    %1196 = vmatprep.subr.mxu0 0.0
    %1197 = vmatpush1.msra.mxu0 0.0
    %1198 = vmatprep.subr.mxu0 0.0
    %1199 = vmatpush1.msra.mxu0 0.0
    %1200 = vmatprep.subr.mxu0 0.0
    %1201 = vmatpush1.msra.mxu0 0.0
    %1202 = vmatprep.subr.mxu0 0.0
    %1203 = vmatpush1.msra.mxu0 0.0
    %1204 = vmatprep.mubr.f32.mxu0 0.0
    %1205 = vmatmul.mubr.f32.gmra.mrb[0].mxu0 %v1138
    %v1206 = vpop.f32.mrb[0].mxu0
    %v1207 = vadd.f32 0.0, %v1206
    %v1208 = vpop.f32.mrb[0].mxu0
    %1209 = vdwg.mxu0
    %v1210 = vadd.f32 %v1137, %v1207
    %v1211 = vxor.u32 %v1210, 2147483648
    %v1212 = vmul.f32 %v1211, 1.442695
    %v1213 = vpow.pop %v1212
    %v1214 = vadd.f32 %v1213, 1.0
    %v1215 = vrcp.pop %v1214
    %v1216 = vmul.f32 1.0, %v1215
    %v1217 = vtanh.pop %v1210
    %v1218 = vmul.f32 %v1216, %v1020
    %1220 = vrot.lane.b32.xlu0 %v1217, 32
    %v1221 = vpop.permute.xlu0 %1220
    %v1223 = vmul.f32 %v1216, %v1221
    %1225 = vrot.lane.b32.xlu0 %v1223, 32
    %v1226 = vpop.permute.xlu0 %1225
    %v1228 = vadd.f32 %v1218, %v1226
    %v1229 = vtanh.pop %v1228
    %1231 = vrot.lane.b32.xlu0 %v1229, 32
    %v1232 = vpop.permute.xlu0 %1231
    %v1234 = vmul.f32 %v1216, %v1232
    %1236 = vrot.lane.b32.xlu0 %v1234, 64
    %v1237 = vpop.permute.xlu0 %1236
    %1240 = vrot.lane.b32.xlu0 %v1132, 96
    %v1241 = vpop.permute.xlu0 %1240
    %v1243 = vsel %vm99, %v1237, %v1241
    %v1245 = vsel %vm203, %v1243, 0
    %1247 = vmatprep.subr.mxu0 0.0
    %1248 = vmatpush1.msra.mxu0 %v77
    %1249 = vmatprep.subr.mxu0 0.0
    %1250 = vmatpush1.msra.mxu0 %v78
    %1251 = vmatprep.subr.mxu0 0.0
    %1252 = vmatpush1.msra.mxu0 %v79
    %1253 = vmatprep.subr.mxu0 0.0
    %1254 = vmatpush1.msra.mxu0 %v80
    %1255 = vmatprep.subr.mxu0 0.0
    %1256 = vmatpush1.msra.mxu0 %v81
    %1257 = vmatprep.subr.mxu0 0.0
    %1258 = vmatpush1.msra.mxu0 %v82
    %1259 = vmatprep.subr.mxu0 0.0
    %1260 = vmatpush1.msra.mxu0 %v83
    %1261 = vmatprep.subr.mxu0 0.0
    %1262 = vmatpush1.msra.mxu0 %v84
    %1263 = vmatprep.subr.mxu0 0.0
    %1264 = vmatpush1.msra.mxu0 0.0
    %1265 = vmatprep.subr.mxu0 0.0
    %1266 = vmatpush1.msra.mxu0 0.0
    %1267 = vmatprep.subr.mxu0 0.0
    %1268 = vmatpush1.msra.mxu0 0.0
    %1269 = vmatprep.subr.mxu0 0.0
    %1270 = vmatpush1.msra.mxu0 0.0
    %1271 = vmatprep.subr.mxu0 0.0
    %1272 = vmatpush1.msra.mxu0 0.0
    %1273 = vmatprep.subr.mxu0 0.0
    %1274 = vmatpush1.msra.mxu0 0.0
    %1275 = vmatprep.subr.mxu0 0.0
    %1276 = vmatpush1.msra.mxu0 0.0
    %1277 = vmatprep.subr.mxu0 0.0
    %1278 = vmatpush1.msra.mxu0 0.0
    %1279 = vmatprep.subr.mxu0 0.0
    %1280 = vmatpush1.msra.mxu0 0.0
    %1281 = vmatprep.subr.mxu0 0.0
    %1282 = vmatpush1.msra.mxu0 0.0
    %1283 = vmatprep.subr.mxu0 0.0
    %1284 = vmatpush1.msra.mxu0 0.0
    %1285 = vmatprep.subr.mxu0 0.0
    %1286 = vmatpush1.msra.mxu0 0.0
    %1287 = vmatprep.subr.mxu0 0.0
    %1288 = vmatpush1.msra.mxu0 0.0
    %1289 = vmatprep.subr.mxu0 0.0
    %1290 = vmatpush1.msra.mxu0 0.0
    %1291 = vmatprep.subr.mxu0 0.0
    %1292 = vmatpush1.msra.mxu0 0.0
    %1293 = vmatprep.subr.mxu0 0.0
    %1294 = vmatpush1.msra.mxu0 0.0
    %1295 = vmatprep.subr.mxu0 0.0
    %1296 = vmatpush1.msra.mxu0 0.0
    %1297 = vmatprep.subr.mxu0 0.0
    %1298 = vmatpush1.msra.mxu0 0.0
    %1299 = vmatprep.subr.mxu0 0.0
    %1300 = vmatpush1.msra.mxu0 0.0
    %1301 = vmatprep.subr.mxu0 0.0
    %1302 = vmatpush1.msra.mxu0 0.0
    %1303 = vmatprep.subr.mxu0 0.0
    %1304 = vmatpush1.msra.mxu0 0.0
    %1305 = vmatprep.subr.mxu0 0.0
    %1306 = vmatpush1.msra.mxu0 0.0
    %1307 = vmatprep.subr.mxu0 0.0
    %1308 = vmatpush1.msra.mxu0 0.0
    %1309 = vmatprep.subr.mxu0 0.0
    %1310 = vmatpush1.msra.mxu0 0.0
    %1311 = vmatprep.mubr.f32.mxu0 0.0
    %1312 = vmatmul.mubr.f32.gmra.mrb[0].mxu0 %v1245
    %v1313 = vpop.f32.mrb[0].mxu0
    %v1314 = vadd.f32 %v90, %v1313
    %v1315 = vpop.f32.mrb[0].mxu0
    %1316 = vdwg.mxu0
    %v1317 = vxor.u32 %v1314, 2147483648
    %v1318 = vmul.f32 %v1317, 1.442695
    %v1319 = vpow.pop %v1318
    %v1320 = vadd.f32 %v1319, 1.0
    %v1321 = vrcp.pop %v1320
    %v1322 = vmul.f32 1.0, %v1321
    %v1323 = vtanh.pop %v1314
    %v1324 = vmul.f32 %v1322, %v1126
    %1326 = vrot.lane.b32.xlu0 %v1323, 32
    %v1327 = vpop.permute.xlu0 %1326
    %v1329 = vmul.f32 %v1322, %v1327
    %1331 = vrot.lane.b32.xlu0 %v1329, 32
    %v1332 = vpop.permute.xlu0 %1331
    %v1334 = vadd.f32 %v1324, %v1332
    %v1335 = vtanh.pop %v1334
    %1337 = vrot.lane.b32.xlu0 %v1335, 32
    %v1338 = vpop.permute.xlu0 %1337
    %v1340 = vmul.f32 %v1322, %v1338
    %1341 = vset.pattern.permute.xlu0 6
    %1342 = vperm.xlu0 %1341, %v93
    %v1343 = vpop.permute.xlu0 %1342
    %vm1344 = vcmp.eq.s32.totalorder %v1343, 1
    %v1345 = vsel %vm1344, %v72, %v67
    %v1346 = vsel %vm99, %v1237, 0
    %1348 = vmatprep.subr.mxu0 0.0
    %1349 = vmatpush1.msra.mxu0 %v73
    %1350 = vmatprep.subr.mxu0 0.0
    %1351 = vmatpush1.msra.mxu0 %v74
    %1352 = vmatprep.subr.mxu0 0.0
    %1353 = vmatpush1.msra.mxu0 %v75
    %1354 = vmatprep.subr.mxu0 0.0
    %1355 = vmatpush1.msra.mxu0 %v76
    %1356 = vmatprep.subr.mxu0 0.0
    %1357 = vmatpush1.msra.mxu0 0.0
    %1358 = vmatprep.subr.mxu0 0.0
    %1359 = vmatpush1.msra.mxu0 0.0
    %1360 = vmatprep.subr.mxu0 0.0
    %1361 = vmatpush1.msra.mxu0 0.0
    %1362 = vmatprep.subr.mxu0 0.0
    %1363 = vmatpush1.msra.mxu0 0.0
    %1364 = vmatprep.subr.mxu0 0.0
    %1365 = vmatpush1.msra.mxu0 0.0
    %1366 = vmatprep.subr.mxu0 0.0
    %1367 = vmatpush1.msra.mxu0 0.0
    %1368 = vmatprep.subr.mxu0 0.0
    %1369 = vmatpush1.msra.mxu0 0.0
    %1370 = vmatprep.subr.mxu0 0.0
    %1371 = vmatpush1.msra.mxu0 0.0
    %1372 = vmatprep.subr.mxu0 0.0
    %1373 = vmatpush1.msra.mxu0 0.0
    %1374 = vmatprep.subr.mxu0 0.0
    %1375 = vmatpush1.msra.mxu0 0.0
    %1376 = vmatprep.subr.mxu0 0.0
    %1377 = vmatpush1.msra.mxu0 0.0
    %1378 = vmatprep.subr.mxu0 0.0
    %1379 = vmatpush1.msra.mxu0 0.0
    %1380 = vmatprep.subr.mxu0 0.0
    %1381 = vmatpush1.msra.mxu0 0.0
    %1382 = vmatprep.subr.mxu0 0.0
    %1383 = vmatpush1.msra.mxu0 0.0
    %1384 = vmatprep.subr.mxu0 0.0
    %1385 = vmatpush1.msra.mxu0 0.0
    %1386 = vmatprep.subr.mxu0 0.0
    %1387 = vmatpush1.msra.mxu0 0.0
    %1388 = vmatprep.subr.mxu0 0.0
    %1389 = vmatpush1.msra.mxu0 0.0
    %1390 = vmatprep.subr.mxu0 0.0
    %1391 = vmatpush1.msra.mxu0 0.0
    %1392 = vmatprep.subr.mxu0 0.0
    %1393 = vmatpush1.msra.mxu0 0.0
    %1394 = vmatprep.subr.mxu0 0.0
    %1395 = vmatpush1.msra.mxu0 0.0
    %1396 = vmatprep.subr.mxu0 0.0
    %1397 = vmatpush1.msra.mxu0 0.0
    %1398 = vmatprep.subr.mxu0 0.0
    %1399 = vmatpush1.msra.mxu0 0.0
    %1400 = vmatprep.subr.mxu0 0.0
    %1401 = vmatpush1.msra.mxu0 0.0
    %1402 = vmatprep.subr.mxu0 0.0
    %1403 = vmatpush1.msra.mxu0 0.0
    %1404 = vmatprep.subr.mxu0 0.0
    %1405 = vmatpush1.msra.mxu0 0.0
    %1406 = vmatprep.subr.mxu0 0.0
    %1407 = vmatpush1.msra.mxu0 0.0
    %1408 = vmatprep.subr.mxu0 0.0
    %1409 = vmatpush1.msra.mxu0 0.0
    %1410 = vmatprep.subr.mxu0 0.0
    %1411 = vmatpush1.msra.mxu0 0.0
    %1412 = vmatprep.mubr.f32.mxu0 0.0
    %1413 = vmatmul.mubr.f32.gmra.mrb[0].mxu0 %v1346
    %v1414 = vpop.f32.mrb[0].mxu0
    %v1415 = vadd.f32 0.0, %v1414
    %v1416 = vpop.f32.mrb[0].mxu0
    %1417 = vdwg.mxu0
    %v1418 = vadd.f32 %v1345, %v1415
    %v1419 = vxor.u32 %v1418, 2147483648
    %v1420 = vmul.f32 %v1419, 1.442695
    %v1421 = vpow.pop %v1420
    %v1422 = vadd.f32 %v1421, 1.0
    %v1423 = vrcp.pop %v1422
    %v1424 = vmul.f32 1.0, %v1423
    %v1425 = vtanh.pop %v1418
    %v1426 = vmul.f32 %v1424, %v1228
    %1428 = vrot.lane.b32.xlu0 %v1425, 32
    %v1429 = vpop.permute.xlu0 %1428
    %v1431 = vmul.f32 %v1424, %v1429
    %1433 = vrot.lane.b32.xlu0 %v1431, 32
    %v1434 = vpop.permute.xlu0 %1433
    %v1436 = vadd.f32 %v1426, %v1434
    %v1437 = vtanh.pop %v1436
    %1439 = vrot.lane.b32.xlu0 %v1437, 32
    %v1440 = vpop.permute.xlu0 %1439
    %v1442 = vmul.f32 %v1424, %v1440
    %1444 = vrot.lane.b32.xlu0 %v1442, 64
    %v1445 = vpop.permute.xlu0 %1444
    %1448 = vrot.lane.b32.xlu0 %v1340, 96
    %v1449 = vpop.permute.xlu0 %1448
    %v1451 = vsel %vm99, %v1445, %v1449
    %v1453 = vsel %vm203, %v1451, 0
    %1455 = vmatprep.subr.mxu0 0.0
    %1456 = vmatpush1.msra.mxu0 %v77
    %1457 = vmatprep.subr.mxu0 0.0
    %1458 = vmatpush1.msra.mxu0 %v78
    %1459 = vmatprep.subr.mxu0 0.0
    %1460 = vmatpush1.msra.mxu0 %v79
    %1461 = vmatprep.subr.mxu0 0.0
    %1462 = vmatpush1.msra.mxu0 %v80
    %1463 = vmatprep.subr.mxu0 0.0
    %1464 = vmatpush1.msra.mxu0 %v81
    %1465 = vmatprep.subr.mxu0 0.0
    %1466 = vmatpush1.msra.mxu0 %v82
    %1467 = vmatprep.subr.mxu0 0.0
    %1468 = vmatpush1.msra.mxu0 %v83
    %1469 = vmatprep.subr.mxu0 0.0
    %1470 = vmatpush1.msra.mxu0 %v84
    %1471 = vmatprep.subr.mxu0 0.0
    %1472 = vmatpush1.msra.mxu0 0.0
    %1473 = vmatprep.subr.mxu0 0.0
    %1474 = vmatpush1.msra.mxu0 0.0
    %1475 = vmatprep.subr.mxu0 0.0
    %1476 = vmatpush1.msra.mxu0 0.0
    %1477 = vmatprep.subr.mxu0 0.0
    %1478 = vmatpush1.msra.mxu0 0.0
    %1479 = vmatprep.subr.mxu0 0.0
    %1480 = vmatpush1.msra.mxu0 0.0
    %1481 = vmatprep.subr.mxu0 0.0
    %1482 = vmatpush1.msra.mxu0 0.0
    %1483 = vmatprep.subr.mxu0 0.0
    %1484 = vmatpush1.msra.mxu0 0.0
    %1485 = vmatprep.subr.mxu0 0.0
    %1486 = vmatpush1.msra.mxu0 0.0
    %1487 = vmatprep.subr.mxu0 0.0
    %1488 = vmatpush1.msra.mxu0 0.0
    %1489 = vmatprep.subr.mxu0 0.0
    %1490 = vmatpush1.msra.mxu0 0.0
    %1491 = vmatprep.subr.mxu0 0.0
    %1492 = vmatpush1.msra.mxu0 0.0
    %1493 = vmatprep.subr.mxu0 0.0
    %1494 = vmatpush1.msra.mxu0 0.0
    %1495 = vmatprep.subr.mxu0 0.0
    %1496 = vmatpush1.msra.mxu0 0.0
    %1497 = vmatprep.subr.mxu0 0.0
    %1498 = vmatpush1.msra.mxu0 0.0
    %1499 = vmatprep.subr.mxu0 0.0
    %1500 = vmatpush1.msra.mxu0 0.0
    %1501 = vmatprep.subr.mxu0 0.0
    %1502 = vmatpush1.msra.mxu0 0.0
    %1503 = vmatprep.subr.mxu0 0.0
    %1504 = vmatpush1.msra.mxu0 0.0
    %1505 = vmatprep.subr.mxu0 0.0
    %1506 = vmatpush1.msra.mxu0 0.0
    %1507 = vmatprep.subr.mxu0 0.0
    %1508 = vmatpush1.msra.mxu0 0.0
    %1509 = vmatprep.subr.mxu0 0.0
    %1510 = vmatpush1.msra.mxu0 0.0
    %1511 = vmatprep.subr.mxu0 0.0
    %1512 = vmatpush1.msra.mxu0 0.0
    %1513 = vmatprep.subr.mxu0 0.0
    %1514 = vmatpush1.msra.mxu0 0.0
    %1515 = vmatprep.subr.mxu0 0.0
    %1516 = vmatpush1.msra.mxu0 0.0
    %1517 = vmatprep.subr.mxu0 0.0
    %1518 = vmatpush1.msra.mxu0 0.0
    %1519 = vmatprep.mubr.f32.mxu0 0.0
    %1520 = vmatmul.mubr.f32.gmra.mrb[0].mxu0 %v1453
    %v1521 = vpop.f32.mrb[0].mxu0
    %v1522 = vadd.f32 %v90, %v1521
    %v1523 = vpop.f32.mrb[0].mxu0
    %1524 = vdwg.mxu0
    %v1525 = vxor.u32 %v1522, 2147483648
    %v1526 = vmul.f32 %v1525, 1.442695
    %v1527 = vpow.pop %v1526
    %v1528 = vadd.f32 %v1527, 1.0
    %v1529 = vrcp.pop %v1528
    %v1530 = vmul.f32 1.0, %v1529
    %v1531 = vtanh.pop %v1522
    %v1532 = vmul.f32 %v1530, %v1334
    %1534 = vrot.lane.b32.xlu0 %v1531, 32
    %v1535 = vpop.permute.xlu0 %1534
    %v1537 = vmul.f32 %v1530, %v1535
    %1539 = vrot.lane.b32.xlu0 %v1537, 32
    %v1540 = vpop.permute.xlu0 %1539
    %v1542 = vadd.f32 %v1532, %v1540
    %v1543 = vtanh.pop %v1542
    %1545 = vrot.lane.b32.xlu0 %v1543, 32
    %v1546 = vpop.permute.xlu0 %1545
    %v1548 = vmul.f32 %v1530, %v1546
    %1549 = vset.pattern.permute.xlu0 7
    %1550 = vperm.xlu0 %1549, %v93
    %v1551 = vpop.permute.xlu0 %1550
    %vm1552 = vcmp.eq.s32.totalorder %v1551, 1
    %v1553 = vsel %vm1552, %v72, %v67
    %v1554 = vsel %vm99, %v1445, 0
    %1556 = vmatprep.subr.mxu0 0.0
    %1557 = vmatpush1.msra.mxu0 %v73
    %1558 = vmatprep.subr.mxu0 0.0
    %1559 = vmatpush1.msra.mxu0 %v74
    %1560 = vmatprep.subr.mxu0 0.0
    %1561 = vmatpush1.msra.mxu0 %v75
    %1562 = vmatprep.subr.mxu0 0.0
    %1563 = vmatpush1.msra.mxu0 %v76
    %1564 = vmatprep.subr.mxu0 0.0
    %1565 = vmatpush1.msra.mxu0 0.0
    %1566 = vmatprep.subr.mxu0 0.0
    %1567 = vmatpush1.msra.mxu0 0.0
    %1568 = vmatprep.subr.mxu0 0.0
    %1569 = vmatpush1.msra.mxu0 0.0
    %1570 = vmatprep.subr.mxu0 0.0
    %1571 = vmatpush1.msra.mxu0 0.0
    %1572 = vmatprep.subr.mxu0 0.0
    %1573 = vmatpush1.msra.mxu0 0.0
    %1574 = vmatprep.subr.mxu0 0.0
    %1575 = vmatpush1.msra.mxu0 0.0
    %1576 = vmatprep.subr.mxu0 0.0
    %1577 = vmatpush1.msra.mxu0 0.0
    %1578 = vmatprep.subr.mxu0 0.0
    %1579 = vmatpush1.msra.mxu0 0.0
    %1580 = vmatprep.subr.mxu0 0.0
    %1581 = vmatpush1.msra.mxu0 0.0
    %1582 = vmatprep.subr.mxu0 0.0
    %1583 = vmatpush1.msra.mxu0 0.0
    %1584 = vmatprep.subr.mxu0 0.0
    %1585 = vmatpush1.msra.mxu0 0.0
    %1586 = vmatprep.subr.mxu0 0.0
    %1587 = vmatpush1.msra.mxu0 0.0
    %1588 = vmatprep.subr.mxu0 0.0
    %1589 = vmatpush1.msra.mxu0 0.0
    %1590 = vmatprep.subr.mxu0 0.0
    %1591 = vmatpush1.msra.mxu0 0.0
    %1592 = vmatprep.subr.mxu0 0.0
    %1593 = vmatpush1.msra.mxu0 0.0
    %1594 = vmatprep.subr.mxu0 0.0
    %1595 = vmatpush1.msra.mxu0 0.0
    %1596 = vmatprep.subr.mxu0 0.0
    %1597 = vmatpush1.msra.mxu0 0.0
    %1598 = vmatprep.subr.mxu0 0.0
    %1599 = vmatpush1.msra.mxu0 0.0
    %1600 = vmatprep.subr.mxu0 0.0
    %1601 = vmatpush1.msra.mxu0 0.0
    %1602 = vmatprep.subr.mxu0 0.0
    %1603 = vmatpush1.msra.mxu0 0.0
    %1604 = vmatprep.subr.mxu0 0.0
    %1605 = vmatpush1.msra.mxu0 0.0
    %1606 = vmatprep.subr.mxu0 0.0
    %1607 = vmatpush1.msra.mxu0 0.0
    %1608 = vmatprep.subr.mxu0 0.0
    %1609 = vmatpush1.msra.mxu0 0.0
    %1610 = vmatprep.subr.mxu0 0.0
    %1611 = vmatpush1.msra.mxu0 0.0
    %1612 = vmatprep.subr.mxu0 0.0
    %1613 = vmatpush1.msra.mxu0 0.0
    %1614 = vmatprep.subr.mxu0 0.0
    %1615 = vmatpush1.msra.mxu0 0.0
    %1616 = vmatprep.subr.mxu0 0.0
    %1617 = vmatpush1.msra.mxu0 0.0
    %1618 = vmatprep.subr.mxu0 0.0
    %1619 = vmatpush1.msra.mxu0 0.0
    %1620 = vmatprep.mubr.f32.mxu0 0.0
    %1621 = vmatmul.mubr.f32.gmra.mrb[0].mxu0 %v1554
    %v1622 = vpop.f32.mrb[0].mxu0
    %v1623 = vadd.f32 0.0, %v1622
    %v1624 = vpop.f32.mrb[0].mxu0
    %1625 = vdwg.mxu0
    %v1626 = vadd.f32 %v1553, %v1623
    %v1627 = vxor.u32 %v1626, 2147483648
    %v1628 = vmul.f32 %v1627, 1.442695
    %v1629 = vpow.pop %v1628
    %v1630 = vadd.f32 %v1629, 1.0
    %v1631 = vrcp.pop %v1630
    %v1632 = vmul.f32 1.0, %v1631
    %v1633 = vtanh.pop %v1626
    %v1634 = vmul.f32 %v1632, %v1436
    %1636 = vrot.lane.b32.xlu0 %v1633, 32
    %v1637 = vpop.permute.xlu0 %1636
    %v1639 = vmul.f32 %v1632, %v1637
    %1641 = vrot.lane.b32.xlu0 %v1639, 32
    %v1642 = vpop.permute.xlu0 %1641
    %v1644 = vadd.f32 %v1634, %v1642
    %v1645 = vtanh.pop %v1644
    %1647 = vrot.lane.b32.xlu0 %v1645, 32
    %v1648 = vpop.permute.xlu0 %1647
    %v1650 = vmul.f32 %v1632, %v1648
    %1652 = vrot.lane.b32.xlu0 %v1650, 64
    %v1653 = vpop.permute.xlu0 %1652
    %1656 = vrot.lane.b32.xlu0 %v1548, 96
    %v1657 = vpop.permute.xlu0 %1656
    %v1659 = vsel %vm99, %v1653, %v1657
    %v1661 = vsel %vm203, %v1659, 0
    %1663 = vmatprep.subr.mxu0 0.0
    %1664 = vmatpush1.msra.mxu0 %v77
    %1665 = vmatprep.subr.mxu0 0.0
    %1666 = vmatpush1.msra.mxu0 %v78
    %1667 = vmatprep.subr.mxu0 0.0
    %1668 = vmatpush1.msra.mxu0 %v79
    %1669 = vmatprep.subr.mxu0 0.0
    %1670 = vmatpush1.msra.mxu0 %v80
    %1671 = vmatprep.subr.mxu0 0.0
    %1672 = vmatpush1.msra.mxu0 %v81
    %1673 = vmatprep.subr.mxu0 0.0
    %1674 = vmatpush1.msra.mxu0 %v82
    %1675 = vmatprep.subr.mxu0 0.0
    %1676 = vmatpush1.msra.mxu0 %v83
    %1677 = vmatprep.subr.mxu0 0.0
    %1678 = vmatpush1.msra.mxu0 %v84
    %1679 = vmatprep.subr.mxu0 0.0
    %1680 = vmatpush1.msra.mxu0 0.0
    %1681 = vmatprep.subr.mxu0 0.0
    %1682 = vmatpush1.msra.mxu0 0.0
    %1683 = vmatprep.subr.mxu0 0.0
    %1684 = vmatpush1.msra.mxu0 0.0
    %1685 = vmatprep.subr.mxu0 0.0
    %1686 = vmatpush1.msra.mxu0 0.0
    %1687 = vmatprep.subr.mxu0 0.0
    %1688 = vmatpush1.msra.mxu0 0.0
    %1689 = vmatprep.subr.mxu0 0.0
    %1690 = vmatpush1.msra.mxu0 0.0
    %1691 = vmatprep.subr.mxu0 0.0
    %1692 = vmatpush1.msra.mxu0 0.0
    %1693 = vmatprep.subr.mxu0 0.0
    %1694 = vmatpush1.msra.mxu0 0.0
    %1695 = vmatprep.subr.mxu0 0.0
    %1696 = vmatpush1.msra.mxu0 0.0
    %1697 = vmatprep.subr.mxu0 0.0
    %1698 = vmatpush1.msra.mxu0 0.0
    %1699 = vmatprep.subr.mxu0 0.0
    %1700 = vmatpush1.msra.mxu0 0.0
    %1701 = vmatprep.subr.mxu0 0.0
    %1702 = vmatpush1.msra.mxu0 0.0
    %1703 = vmatprep.subr.mxu0 0.0
    %1704 = vmatpush1.msra.mxu0 0.0
    %1705 = vmatprep.subr.mxu0 0.0
    %1706 = vmatpush1.msra.mxu0 0.0
    %1707 = vmatprep.subr.mxu0 0.0
    %1708 = vmatpush1.msra.mxu0 0.0
    %1709 = vmatprep.subr.mxu0 0.0
    %1710 = vmatpush1.msra.mxu0 0.0
    %1711 = vmatprep.subr.mxu0 0.0
    %1712 = vmatpush1.msra.mxu0 0.0
    %1713 = vmatprep.subr.mxu0 0.0
    %1714 = vmatpush1.msra.mxu0 0.0
    %1715 = vmatprep.subr.mxu0 0.0
    %1716 = vmatpush1.msra.mxu0 0.0
    %1717 = vmatprep.subr.mxu0 0.0
    %1718 = vmatpush1.msra.mxu0 0.0
    %1719 = vmatprep.subr.mxu0 0.0
    %1720 = vmatpush1.msra.mxu0 0.0
    %1721 = vmatprep.subr.mxu0 0.0
    %1722 = vmatpush1.msra.mxu0 0.0
    %1723 = vmatprep.subr.mxu0 0.0
    %1724 = vmatpush1.msra.mxu0 0.0
    %1725 = vmatprep.subr.mxu0 0.0
    %1726 = vmatpush1.msra.mxu0 0.0
    %1727 = vmatprep.mubr.f32.mxu0 0.0
    %1728 = vmatmul.mubr.f32.gmra.mrb[0].mxu0 %v1661
    %v1729 = vpop.f32.mrb[0].mxu0
    %v1730 = vadd.f32 %v90, %v1729
    %v1731 = vpop.f32.mrb[0].mxu0
    %1732 = vdwg.mxu0
    %v1733 = vxor.u32 %v1730, 2147483648
    %v1734 = vmul.f32 %v1733, 1.442695
    %v1735 = vpow.pop %v1734
    %v1736 = vadd.f32 %v1735, 1.0
    %v1737 = vrcp.pop %v1736
    %v1738 = vmul.f32 1.0, %v1737
    %v1739 = vtanh.pop %v1730
    %v1740 = vmul.f32 %v1738, %v1542
    %1742 = vrot.lane.b32.xlu0 %v1739, 32
    %v1743 = vpop.permute.xlu0 %1742
    %v1745 = vmul.f32 %v1738, %v1743
    %1747 = vrot.lane.b32.xlu0 %v1745, 32
    %v1748 = vpop.permute.xlu0 %1747
    %v1750 = vadd.f32 %v1740, %v1748
    %v1751 = vtanh.pop %v1750
    %1753 = vrot.lane.b32.xlu0 %v1751, 32
    %v1754 = vpop.permute.xlu0 %1753
    %v1756 = vmul.f32 %v1738, %v1754
    %v1757 = vld [vmem:[%s5] sm:$0x1]
    %v1759 = vlaneseq
    %v1760 = vshrl.u32 %v1759, 7
    %v1761 = vsub.s32 0, %v1760
    %v1762 = vrot.slane %v1757, %v1761
    %1763 = vrot.lane.b32.xlu0 %v1762, 64
    %v1764 = vpop.permute.xlu0 %1763
    %v1766 = vmul.f32 %v1756, %v1764
    %1768 = vrot.lane.b32.xlu0 %v1766, 64
    %v1769 = vpop.permute.xlu0 %1768
    %vm1771 = vcmask 254976
    %v1772 = vsel %vm1771, %v1769, 0.0
    %1773 = vadd.xlane.f32.xlu0 %v1772
    %v1774 = vpop.xlane.xlu0 %1773
    %vm1775 = vcmask 1024
    %1776 = vst.msk [vmem:[%s6] sm:$0x3] %vm1775, %v1774
    // Predicated region
    $region38: #{tpu_custom_call.1} parent=1 // pred_check
      _
    $region39: #{tpu_custom_call.1} parent=1 // pred_check_branch
      %1778 = sbr.rel (0) target = $region41
    $region40: #{tpu_custom_call.1} parent=1 // pred_region
      _
    $region41: #{tpu_custom_call.1} parent=1 // pred_fallthru
      _
    // Predicated region
    $region42: #{tpu_custom_call.1} parent=1 // pred_check
      _
    $region43: #{tpu_custom_call.1} parent=1 // pred_check_branch
      %1780 = sbr.rel (0) target = $region45
    $region44: #{tpu_custom_call.1} parent=1 // pred_region
      _
    $region45: #{tpu_custom_call.1} parent=1 // pred_fallthru
      _
    %1781 = vsyncpa [#allocation3], 1
    %1782 = vsyncpa [#allocation5], 1

</llo_original>
